<compile_context>
chip_gen: v5e
topology: v5e:2x2
jax: 0.10.0
libtpu: 0.0.40
codegen_flags: <defaults>
</compile_context>

<pallas_src>
import numpy as np
import jax
import jax.numpy as jnp
from jax import lax
from jax.experimental import pallas as pl
from jax.experimental.pallas import tpu as pltpu


# --------------------------------------------------------------------------
# VMEM budgeting / tiling helpers
# --------------------------------------------------------------------------
def _vmem_params():
    """(per-step byte budget incl. double buffering, vmem_limit_bytes)."""
    try:
        cap = int(pltpu.get_tpu_info().vmem_capacity_bytes)
    except Exception:
        cap = 64 << 20                      # conservative: v7x per-core VMEM
    if cap >= (96 << 20):                   # v5e / v6e: 128 MiB physical
        return 20 << 20, 64 << 20
    return 10 << 20, 40 << 20               # v7x: 64 MiB physical


def _ceil_to(v, m):
    return -(-v // m) * m


def _divisors(n_):
    out, i = set(), 1
    while i * i <= n_:
        if n_ % i == 0:
            out.add(i)
            out.add(n_ // i)
        i += 1
    return sorted(out)


def _pick_tile(total, valid, step_bytes, budget):
    cands = [d for d in _divisors(total) if valid(d)] or [total]
    fitting = [d for d in cands if step_bytes(d) <= budget]
    return max(fitting) if fitting else min(cands)


# --------------------------------------------------------------------------
# Kernel A: "down" = Conv2d(C, C/2, k=3, s=2, p=1, groups=C/2, bias=False)
# Input arrives as 8 parity planes P[p,ry,rc][g,i,j] = sx[b, 2g+p, 2i+ry, 2j+rc]
# (one wrapper rearrange, 1.0x traffic).  Taps are rebuilt with in-VMEM shifts.
# --------------------------------------------------------------------------
def _shift_right(v):                        # v[..., j] -> v[..., j-1], 0 at j=0
    z = jnp.zeros(v.shape[:-1] + (1,), v.dtype)
    return jnp.concatenate([z, v[..., :-1]], axis=-1)


def _shift_down(v):                         # v[..., i, :] -> v[..., i-1, :], 0 at i=0
    z = jnp.zeros(v.shape[:-2] + (1, v.shape[-1]), v.dtype)
    return jnp.concatenate([z, v[..., :-1, :]], axis=-2)


def _down_kernel(x_ref, w_ref, o_ref):
    # x_ref: (1, 8, Gt, h, w)   parity planes, plane index t = p*4 + ry*2 + rc
    # w_ref: (2, 3, 3, Gt, 1, 1)  conv taps (p, dy, dx) per group
    # o_ref: (1, Gt, h, w)
    wv = w_ref[...]                          # loaded once (hoisted)
    acc = jnp.zeros(o_ref.shape[1:], jnp.float32)
    for p in range(2):
        p00 = x_ref[0, 4 * p + 0]            # rows even, cols even
        p01 = x_ref[0, 4 * p + 1]            # rows even, cols odd
        p10 = x_ref[0, 4 * p + 2]            # rows odd,  cols even
        p11 = x_ref[0, 4 * p + 3]            # rows odd,  cols odd
        acc = acc + (wv[p, 1, 1] * p00 + wv[p, 1, 2] * p01
                     + wv[p, 2, 1] * p10 + wv[p, 2, 2] * p11)
        acc = acc + _shift_right(wv[p, 1, 0] * p01 + wv[p, 2, 0] * p11)
        acc = acc + _shift_down(wv[p, 0, 1] * p10 + wv[p, 0, 2] * p11
                                + _shift_right(wv[p, 0, 0] * p11))
    o_ref[0] = acc


def down_conv(sx, w_down, budget, vmem_limit):
    """sx: (B, C, H, W) f32; w_down: (C//2, 2, 3, 3). Returns (B, C//2, h, w)."""
    B, C, H, W = sx.shape
    assert C % 2 == 0 and H % 2 == 0 and W % 2 == 0
    G, h, w = C // 2, H // 2, W // 2

    # Single rearrange into parity planes (same total volume as sx).
    # TODO(synk): a fully fused variant would gather the strided planes inside
    # the kernel with manual strided DMA (memory_space=pl.ANY) and skip this.
    planes = sx.reshape(B, G, 2, h, 2, w, 2).transpose(0, 2, 4, 6, 1, 3, 5)
    planes = planes.reshape(B, 8, G, h, w)
    wt = jnp.transpose(w_down, (1, 2, 3, 0))[..., None, None].astype(jnp.float32)

    hp, wp = _ceil_to(h, 8), _ceil_to(w, 128)

    def step_bytes(gt):
        data = 9 * gt * hp * wp * 4          # 8 input planes + 1 output slab
        wts = 18 * gt * 8 * 128 * 4          # trailing (1,1) pads to a vreg tile
        return 2 * (data + wts)              # double-buffered

    gt = _pick_tile(G, lambda d: True, step_bytes, budget)

    return pl.pallas_call(
        _down_kernel,
        out_shape=jax.ShapeDtypeStruct((B, G, h, w), jnp.float32),
        grid=(B, G // gt),
        in_specs=[
            pl.BlockSpec((1, 8, gt, h, w), lambda b, g: (b, 0, g, 0, 0)),
            pl.BlockSpec((2, 3, 3, gt, 1, 1), lambda b, g: (0, 0, 0, g, 0, 0)),
        ],
        out_specs=pl.BlockSpec((1, gt, h, w), lambda b, g: (b, g, 0, 0)),
        compiler_params=pltpu.CompilerParams(
            dimension_semantics=("parallel", "parallel"),
            vmem_limit_bytes=vmem_limit),
    )(planes, wt)


# --------------------------------------------------------------------------
# Kernel B: per-cluster channel-mean maps  v5[b] = M @ x_flat[b]
# --------------------------------------------------------------------------
def _cluster_mean_kernel(m_ref, x_ref, o_ref):
    o_ref[0] = jnp.dot(m_ref[...], x_ref[0], preferred_element_type=jnp.float32)


def cluster_mean(x_flat, M, budget, vmem_limit):
    """x_flat: (B, G, hw); M: (k, G) row-normalized assignment. -> (B, k, hw)"""
    B, G, hw = x_flat.shape
    k = M.shape[0]
    gp, kp_ = _ceil_to(G, 8), _ceil_to(k, 8)

    def step_bytes(tl):
        tlp = _ceil_to(tl, 128)
        return 2 * ((gp + kp_) * tlp * 4 + kp_ * _ceil_to(G, 128) * 4)

    tl = _pick_tile(hw, lambda d: d == hw or d % 128 == 0, step_bytes, budget)

    return pl.pallas_call(
        _cluster_mean_kernel,
        out_shape=jax.ShapeDtypeStruct((B, k, hw), jnp.float32),
        grid=(B, hw // tl),
        in_specs=[
            pl.BlockSpec((k, G), lambda b, s: (0, 0)),
            pl.BlockSpec((1, G, tl), lambda b, s: (b, 0, s)),
        ],
        out_specs=pl.BlockSpec((1, k, tl), lambda b, s: (b, 0, s)),
        compiler_params=pltpu.CompilerParams(
            dimension_semantics=("parallel", "parallel"),
            vmem_limit_bytes=vmem_limit),
    )(M, x_flat)


# --------------------------------------------------------------------------
# Kernel C: fused  (1+gate)*x -> bilinear x2 (align_corners=True, as two 2-D
# matmuls per group) -> grouped 1x1 "up" conv (per-channel scalar, commuted
# past the linear resize, folded with the gate into coeff) -> + sx residual.
# Grid: (batch, H-row-tile); the residual sx is aliased to the output.
# --------------------------------------------------------------------------
def _fuse_kernel(coeff_ref, x_ref, ry_ref, rxt_ref, sx_ref, o_ref):
    b = pl.program_id(0)
    ry = ry_ref[...]                         # (TH, h)
    rxt = rxt_ref[...]                       # (w, W)
    G = x_ref.shape[1]

    def one_group(g):
        u = jnp.dot(ry, x_ref[0, g], preferred_element_type=jnp.float32)   # (TH, w)
        u = jnp.dot(u, rxt, preferred_element_type=jnp.float32)            # (TH, W)
        c0 = 2 * g
        o_ref[0, c0] = coeff_ref[b, c0] * u + sx_ref[0, c0]
        o_ref[0, c0 + 1] = coeff_ref[b, c0 + 1] * u + sx_ref[0, c0 + 1]

    if G <= 32:                              # small group count: static unroll
        for g in range(G):
            one_group(g)
    else:                                    # keep trace / compile time bounded
        @pl.loop(0, G)
        def _(g):
            one_group(g)


def _interp_matrix(out_size, in_size):
    """Bilinear interpolation matrix, align_corners=True (as the reference)."""
    M = np.zeros((out_size, in_size), np.float32)
    if out_size == 1 or in_size == 1:
        M[:, 0] = 1.0
        return M
    scale = (in_size - 1) / (out_size - 1)
    for o in range(out_size):
        s = o * scale
        i0 = min(int(np.floor(s)), in_size - 1)
        i1 = min(i0 + 1, in_size - 1)
        f = s - i0
        M[o, i0] += 1.0 - f
        M[o, i1] += f
    return M


def fuse_up(x, coeff, sx, budget, vmem_limit):
    """x: (B, G, h, w); coeff: (B, C) per-channel scalars; sx: (B, C, H, W)."""
    B, G, h, w = x.shape
    _, C, H, W = sx.shape
    ry = jnp.asarray(_interp_matrix(H, h))       # (H, h)
    rxt = jnp.asarray(_interp_matrix(W, w).T)    # (w, W)
    wp = _ceil_to(W, 128)

    def step_bytes(th):
        thp = _ceil_to(th, 8)
        out_sx = 2 * C * thp * wp * 4            # sx block + out block
        xin = G * _ceil_to(h, 8) * _ceil_to(w, 128) * 4
        mats = thp * _ceil_to(h, 128) * 4 + _ceil_to(w, 8) * wp * 4
        return 2 * (out_sx + xin + mats)

    th = _pick_tile(H, lambda d: d == H or d % 8 == 0, step_bytes, budget)

    return pl.pallas_call(
        _fuse_kernel,
        out_shape=jax.ShapeDtypeStruct((B, C, H, W), jnp.float32),
        grid=(B, H // th),
        in_specs=[
            pl.BlockSpec(memory_space=pltpu.MemorySpace.SMEM),          # coeff (B, C)
            pl.BlockSpec((1, G, h, w), lambda b, t: (b, 0, 0, 0)),      # x (per batch)
            pl.BlockSpec((th, h), lambda b, t: (t, 0)),                 # Ry row tile
            pl.BlockSpec((w, W), lambda b, t: (0, 0)),                  # Rx^T
            pl.BlockSpec((1, C, th, W), lambda b, t: (b, 0, t, 0)),     # sx residual
        ],
        out_specs=pl.BlockSpec((1, C, th, W), lambda b, t: (b, 0, t, 0)),
        input_output_aliases={4: 0},
        compiler_params=pltpu.CompilerParams(
            dimension_semantics=("parallel", "parallel"),
            vmem_limit_bytes=vmem_limit),
    )(coeff, x, ry, rxt, sx)


# --------------------------------------------------------------------------
# On-device replacements for the sklearn fits (fixed-iteration, jittable).
# --------------------------------------------------------------------------
def _minmax_scale_rows(x):
    mn = x.min(axis=1, keepdims=True)
    mx = x.max(axis=1, keepdims=True)
    return (x - mn) / jnp.where(mx - mn == 0, 1.0, mx - mn)


def _kmeans_labels(xs, k, iters=25):
    # TODO(synk): sklearn KMeans (k-means++ random init, n_init=10, tol) has no
    # clean Pallas/JAX equivalent; deterministic farthest-point init + fixed Lloyd.
    def sqdist(a, b):
        return ((a[:, None, :] - b[None, :, :]) ** 2).sum(-1)

    centers = jnp.zeros((k, xs.shape[1]), xs.dtype).at[0].set(xs[0])
    mind = ((xs - xs[0][None]) ** 2).sum(-1)
    for kk in range(1, k):
        idx = jnp.argmax(mind)
        centers = centers.at[kk].set(xs[idx])
        mind = jnp.minimum(mind, ((xs - xs[idx][None]) ** 2).sum(-1))

    def step(c, _):
        lab = jnp.argmin(sqdist(xs, c), axis=1)
        oh = jax.nn.one_hot(lab, k, dtype=xs.dtype)
        cnt = oh.sum(0)
        newc = (oh.T @ xs) / jnp.maximum(cnt, 1.0)[:, None]
        newc = jnp.where(cnt[:, None] > 0, newc, c)
        return newc, None

    centers, _ = lax.scan(step, centers, None, length=iters)
    return jnp.argmin(sqdist(xs, centers), axis=1)


def _gmm_diag_fit(data, n, iters=40, reg=1e-6):
    # TODO(synk): sklearn GaussianMixture (kmeans init, tol stop, float64) not
    # reproduced; deterministic sorted-split init + fixed f32 EM iterations (diag).
    m, _ = data.shape
    order = jnp.argsort(data.sum(1))
    means, covs, weights = [], [], []
    for i in range(n):
        chunk = order[i * m // n:(i + 1) * m // n]
        seg = data[chunk]
        means.append(seg.mean(0))
        covs.append(seg.var(0) + reg)
        weights.append(jnp.float32(chunk.shape[0] / m))
    means, covs, weights = jnp.stack(means), jnp.stack(covs), jnp.stack(weights)

    def em(carry, _):
        mu, cv, wgt = carry
        diff = data[None] - mu[:, None]                              # (n, m, d)
        logp = (-0.5 * (diff ** 2 / cv[:, None]).sum(-1)
                - 0.5 * jnp.log(2.0 * jnp.pi * cv).sum(-1)[:, None]
                + jnp.log(wgt + 1e-12)[:, None])                     # (n, m)
        logp = logp - logp.max(0, keepdims=True)
        p = jnp.exp(logp)
        resp = p / p.sum(0, keepdims=True)
        nk = resp.sum(1) + 1e-10
        mu = (resp @ data) / nk[:, None]
        diff = data[None] - mu[:, None]
        cv = (resp[:, :, None] * diff ** 2).sum(1) / nk[:, None] + reg
        wgt = nk / m
        return (mu, cv, wgt), None

    (means, covs, _), _ = lax.scan(em, (means, covs, weights), None, length=iters)
    return means, covs


def init_params(channel, k, n, key):
    G = channel // 2
    k1, k2, k3 = jax.random.split(key, 3)

    def uinit(kk, shape, fan_in):
        bound = float(np.sqrt(3.0 / fan_in))
        return jax.random.uniform(kk, shape, jnp.float32, -bound, bound)

    return {
        "w_down": uinit(k1, (G, 2, 3, 3), 2 * 9),    # Conv2d(C, C/2, 3, groups=C/2)
        "w_conv": uinit(k2, (k, 1, n, 1), n),        # Conv2d(k, k, (n,1), groups=k)
        "w_up": uinit(k3, (channel, 1, 1, 1), 1),    # Conv2d(C/2, C, 1, groups=C/2)
    }


# --------------------------------------------------------------------------
# Full forward pass (jittable end-to-end; no host round trips).
# --------------------------------------------------------------------------
def ucoea_forward(sx, params, k, n):
    B, C, H, W = sx.shape
    G = C // 2
    budget, vmem_limit = _vmem_params()
    sx = sx.astype(jnp.float32)

    # 1) grouped stride-2 3x3 down conv                    (Pallas kernel A)
    x = down_conv(sx, params["w_down"], budget, vmem_limit)       # (B, G, h, w)
    h, w = x.shape[2], x.shape[3]
    x_flat = x.reshape(B, G, h * w)

    # 2) channel clustering on one sample (on-device fixed-iteration Lloyd)
    # TODO(synk): reference picks r = random.randint(0, b-1); fixed to r = 0.
    xx = x_flat[0]                                                # (G, hw)
    labels = _kmeans_labels(_minmax_scale_rows(xx), k)            # (G,)
    oh = jax.nn.one_hot(labels, k, dtype=jnp.float32)             # (G, k)
    cnt = oh.sum(0)
    cmean = (oh.T @ xx) / jnp.maximum(cnt, 1.0)[:, None]          # (k, hw)
    v22 = jnp.where(cnt > 0, jnp.std(cmean, axis=1), jnp.inf)
    order = jnp.argsort(v22)
    inv = jnp.argsort(order)
    M = (oh[:, order] / jnp.maximum(cnt[order], 1.0)[None, :]).T  # (k, G)

    # 3) per-cluster channel-mean maps                      (Pallas kernel B)
    v5 = cluster_mean(x_flat, M, budget, vmem_limit)              # (B, k, hw)
    wa = jnp.swapaxes(v5, 1, 2)                                   # (B, hw, k)

    # 4) per-sample diag GMM over the k cluster-mean features (on-device, vmapped)
    means, covs = jax.vmap(lambda d: _gmm_diag_fit(d, n))(wa)     # (B, n, k) each
    v6 = jnp.swapaxes(jnp.nan_to_num(means), 1, 2)                # (B, k, n)
    v66 = jnp.swapaxes(jnp.nan_to_num(covs), 1, 2)

    # 5) order components by covariance (matches the reference's n == 2 swap)
    box = jnp.take_along_axis(v6, jnp.argsort(v66, axis=2), axis=2)

    # 6) grouped (n,1) conv + sigmoid -> per-cluster gate
    wconv = params["w_conv"][:, 0, :, 0].astype(jnp.float32)      # (k, n)
    y = jax.nn.sigmoid((box * wconv[None]).sum(-1))               # (B, k)

    # 7) per-channel gate folded with the grouped 1x1 up-conv scalars
    gate = jnp.take(y, jnp.take(inv, labels), axis=1)             # (B, G)
    wu = params["w_up"].reshape(-1).astype(jnp.float32)           # (C,)
    coeff = wu[None, :] * (1.0 + jnp.repeat(gate, 2, axis=1))     # (B, C)

    # 8) fused gate*x -> bilinear x2 -> up conv -> + sx     (Pallas kernel C)
    return fuse_up(x, coeff, sx, budget, vmem_limit)


if __name__ == "__main__":
    channel, k, n = 8, 2, 2
    B, H, W = 2, 16, 16
    key = jax.random.PRNGKey(0)
    kx, kp = jax.random.split(key)
    sx = jax.random.normal(kx, (B, channel, H, W), jnp.float32)
    params = init_params(channel, k, n, kp)

    fwd = jax.jit(ucoea_forward, static_argnames=("k", "n"))
    out = fwd(sx, params, k=k, n=n)
    out = jax.block_until_ready(out)
    assert out.shape == (B, channel, H, W)
    assert np.isfinite(np.asarray(out)).all()
    print("KERNEL_OK")
</pallas_src>

<mosaic_0001>
module attributes {stable_mosaic.version = 11 : i64} {
  func.func @_down_kernel(%arg0: i32, %arg1: i32, %arg2: memref<1x8x4x8x8xf32, #tpu.memory_space<vmem>>, %arg3: memref<2x3x3x4x1x1xf32, #tpu.memory_space<vmem>>, %arg4: memref<1x4x8x8xf32, #tpu.memory_space<vmem>>) attributes {dimension_semantics = [#tpu.dimension_semantics<parallel>, #tpu.dimension_semantics<parallel>], iteration_bounds = array<i64: 2, 1>, scalar_prefetch = 0 : i64, scratch_operands = 0 : i64, tpu.core_type = #tpu.core_type<tc>, window_params = [{transform_indices = @transform_0, window_bounds = array<i64: 1, 8, 4, 8, 8>}, {transform_indices = @transform_1, window_bounds = array<i64: 2, 3, 3, 4, 1, 1>}, {transform_indices = @transform_2, window_bounds = array<i64: 1, 4, 8, 8>}]} {
    %c0 = arith.constant 0 : index
    %c0_0 = arith.constant 0 : index
    %c0_1 = arith.constant 0 : index
    %c0_2 = arith.constant 0 : index
    %c0_3 = arith.constant 0 : index
    %c0_4 = arith.constant 0 : index
    %0 = vector.load %arg3[%c0, %c0_0, %c0_1, %c0_2, %c0_3, %c0_4] : memref<2x3x3x4x1x1xf32, #tpu.memory_space<vmem>>, vector<2x3x3x4x1x1xf32>
    %cst = arith.constant 0.000000e+00 : f32
    %1 = vector.broadcast %cst : f32 to vector<4x8x8xf32>
    %c0_5 = arith.constant 0 : index
    %c0_6 = arith.constant 0 : index
    %c0_7 = arith.constant 0 : index
    %c0_8 = arith.constant 0 : index
    %c0_9 = arith.constant 0 : index
    %2 = vector.load %arg2[%c0_5, %c0_6, %c0_7, %c0_8, %c0_9] : memref<1x8x4x8x8xf32, #tpu.memory_space<vmem>>, vector<1x1x4x8x8xf32>
    %3 = vector.shape_cast %2 : vector<1x1x4x8x8xf32> to vector<4x8x8xf32>
    %c0_10 = arith.constant 0 : index
    %c1 = arith.constant 1 : index
    %c0_11 = arith.constant 0 : index
    %c0_12 = arith.constant 0 : index
    %c0_13 = arith.constant 0 : index
    %4 = vector.load %arg2[%c0_10, %c1, %c0_11, %c0_12, %c0_13] : memref<1x8x4x8x8xf32, #tpu.memory_space<vmem>>, vector<1x1x4x8x8xf32>
    %5 = vector.shape_cast %4 : vector<1x1x4x8x8xf32> to vector<4x8x8xf32>
    %c0_14 = arith.constant 0 : index
    %c2 = arith.constant 2 : index
    %c0_15 = arith.constant 0 : index
    %c0_16 = arith.constant 0 : index
    %c0_17 = arith.constant 0 : index
    %6 = vector.load %arg2[%c0_14, %c2, %c0_15, %c0_16, %c0_17] : memref<1x8x4x8x8xf32, #tpu.memory_space<vmem>>, vector<1x1x4x8x8xf32>
    %7 = vector.shape_cast %6 : vector<1x1x4x8x8xf32> to vector<4x8x8xf32>
    %c0_18 = arith.constant 0 : index
    %c3 = arith.constant 3 : index
    %c0_19 = arith.constant 0 : index
    %c0_20 = arith.constant 0 : index
    %c0_21 = arith.constant 0 : index
    %8 = vector.load %arg2[%c0_18, %c3, %c0_19, %c0_20, %c0_21] : memref<1x8x4x8x8xf32, #tpu.memory_space<vmem>>, vector<1x1x4x8x8xf32>
    %9 = vector.shape_cast %8 : vector<1x1x4x8x8xf32> to vector<4x8x8xf32>
    %10 = vector.extract_strided_slice %0 {offsets = [0, 1, 1, 0, 0, 0], sizes = [1, 1, 1, 4, 1, 1], strides = [1, 1, 1, 1, 1, 1]} : vector<2x3x3x4x1x1xf32> to vector<1x1x1x4x1x1xf32>
    %11 = vector.shape_cast %10 : vector<1x1x1x4x1x1xf32> to vector<4x1x1xf32>
    %12 = vector.broadcast %11 : vector<4x1x1xf32> to vector<4x8x8xf32>
    %13 = arith.mulf %12, %3 : vector<4x8x8xf32>
    %14 = vector.extract_strided_slice %0 {offsets = [0, 1, 2, 0, 0, 0], sizes = [1, 1, 1, 4, 1, 1], strides = [1, 1, 1, 1, 1, 1]} : vector<2x3x3x4x1x1xf32> to vector<1x1x1x4x1x1xf32>
    %15 = vector.shape_cast %14 : vector<1x1x1x4x1x1xf32> to vector<4x1x1xf32>
    %16 = vector.broadcast %15 : vector<4x1x1xf32> to vector<4x8x8xf32>
    %17 = arith.mulf %16, %5 : vector<4x8x8xf32>
    %18 = arith.addf %13, %17 : vector<4x8x8xf32>
    %19 = vector.extract_strided_slice %0 {offsets = [0, 2, 1, 0, 0, 0], sizes = [1, 1, 1, 4, 1, 1], strides = [1, 1, 1, 1, 1, 1]} : vector<2x3x3x4x1x1xf32> to vector<1x1x1x4x1x1xf32>
    %20 = vector.shape_cast %19 : vector<1x1x1x4x1x1xf32> to vector<4x1x1xf32>
    %21 = vector.broadcast %20 : vector<4x1x1xf32> to vector<4x8x8xf32>
    %22 = arith.mulf %21, %7 : vector<4x8x8xf32>
    %23 = arith.addf %18, %22 : vector<4x8x8xf32>
    %24 = vector.extract_strided_slice %0 {offsets = [0, 2, 2, 0, 0, 0], sizes = [1, 1, 1, 4, 1, 1], strides = [1, 1, 1, 1, 1, 1]} : vector<2x3x3x4x1x1xf32> to vector<1x1x1x4x1x1xf32>
    %25 = vector.shape_cast %24 : vector<1x1x1x4x1x1xf32> to vector<4x1x1xf32>
    %26 = vector.broadcast %25 : vector<4x1x1xf32> to vector<4x8x8xf32>
    %27 = arith.mulf %26, %9 : vector<4x8x8xf32>
    %28 = arith.addf %23, %27 : vector<4x8x8xf32>
    %29 = arith.addf %1, %28 : vector<4x8x8xf32>
    %30 = vector.extract_strided_slice %0 {offsets = [0, 1, 0, 0, 0, 0], sizes = [1, 1, 1, 4, 1, 1], strides = [1, 1, 1, 1, 1, 1]} : vector<2x3x3x4x1x1xf32> to vector<1x1x1x4x1x1xf32>
    %31 = vector.shape_cast %30 : vector<1x1x1x4x1x1xf32> to vector<4x1x1xf32>
    %32 = vector.broadcast %31 : vector<4x1x1xf32> to vector<4x8x8xf32>
    %33 = arith.mulf %32, %5 : vector<4x8x8xf32>
    %34 = vector.extract_strided_slice %0 {offsets = [0, 2, 0, 0, 0, 0], sizes = [1, 1, 1, 4, 1, 1], strides = [1, 1, 1, 1, 1, 1]} : vector<2x3x3x4x1x1xf32> to vector<1x1x1x4x1x1xf32>
    %35 = vector.shape_cast %34 : vector<1x1x1x4x1x1xf32> to vector<4x1x1xf32>
    %36 = vector.broadcast %35 : vector<4x1x1xf32> to vector<4x8x8xf32>
    %37 = arith.mulf %36, %9 : vector<4x8x8xf32>
    %38 = arith.addf %33, %37 : vector<4x8x8xf32>
    %cst_22 = arith.constant 0.000000e+00 : f32
    %39 = vector.broadcast %cst_22 : f32 to vector<4x8x1xf32>
    %40 = vector.extract_strided_slice %38 {offsets = [0, 0, 0], sizes = [4, 8, 7], strides = [1, 1, 1]} : vector<4x8x8xf32> to vector<4x8x7xf32>
    %41 = tpu.concatenate %39, %40 in 2 : vector<4x8x1xf32>, vector<4x8x7xf32> -> vector<4x8x8xf32>
    %42 = arith.addf %29, %41 : vector<4x8x8xf32>
    %43 = vector.extract_strided_slice %0 {offsets = [0, 0, 1, 0, 0, 0], sizes = [1, 1, 1, 4, 1, 1], strides = [1, 1, 1, 1, 1, 1]} : vector<2x3x3x4x1x1xf32> to vector<1x1x1x4x1x1xf32>
    %44 = vector.shape_cast %43 : vector<1x1x1x4x1x1xf32> to vector<4x1x1xf32>
    %45 = vector.broadcast %44 : vector<4x1x1xf32> to vector<4x8x8xf32>
    %46 = arith.mulf %45, %7 : vector<4x8x8xf32>
    %47 = vector.extract_strided_slice %0 {offsets = [0, 0, 2, 0, 0, 0], sizes = [1, 1, 1, 4, 1, 1], strides = [1, 1, 1, 1, 1, 1]} : vector<2x3x3x4x1x1xf32> to vector<1x1x1x4x1x1xf32>
    %48 = vector.shape_cast %47 : vector<1x1x1x4x1x1xf32> to vector<4x1x1xf32>
    %49 = vector.broadcast %48 : vector<4x1x1xf32> to vector<4x8x8xf32>
    %50 = arith.mulf %49, %9 : vector<4x8x8xf32>
    %51 = arith.addf %46, %50 : vector<4x8x8xf32>
    %52 = vector.extract_strided_slice %0 {offsets = [0, 0, 0, 0, 0, 0], sizes = [1, 1, 1, 4, 1, 1], strides = [1, 1, 1, 1, 1, 1]} : vector<2x3x3x4x1x1xf32> to vector<1x1x1x4x1x1xf32>
    %53 = vector.shape_cast %52 : vector<1x1x1x4x1x1xf32> to vector<4x1x1xf32>
    %54 = vector.broadcast %53 : vector<4x1x1xf32> to vector<4x8x8xf32>
    %55 = arith.mulf %54, %9 : vector<4x8x8xf32>
    %cst_23 = arith.constant 0.000000e+00 : f32
    %56 = vector.broadcast %cst_23 : f32 to vector<4x8x1xf32>
    %57 = vector.extract_strided_slice %55 {offsets = [0, 0, 0], sizes = [4, 8, 7], strides = [1, 1, 1]} : vector<4x8x8xf32> to vector<4x8x7xf32>
    %58 = tpu.concatenate %56, %57 in 2 : vector<4x8x1xf32>, vector<4x8x7xf32> -> vector<4x8x8xf32>
    %59 = arith.addf %51, %58 : vector<4x8x8xf32>
    %cst_24 = arith.constant 0.000000e+00 : f32
    %60 = vector.broadcast %cst_24 : f32 to vector<4x1x8xf32>
    %61 = vector.extract_strided_slice %59 {offsets = [0, 0, 0], sizes = [4, 7, 8], strides = [1, 1, 1]} : vector<4x8x8xf32> to vector<4x7x8xf32>
    %62 = tpu.concatenate %60, %61 in 1 : vector<4x1x8xf32>, vector<4x7x8xf32> -> vector<4x8x8xf32>
    %63 = arith.addf %42, %62 : vector<4x8x8xf32>
    %c0_25 = arith.constant 0 : index
    %c4 = arith.constant 4 : index
    %c0_26 = arith.constant 0 : index
    %c0_27 = arith.constant 0 : index
    %c0_28 = arith.constant 0 : index
    %64 = vector.load %arg2[%c0_25, %c4, %c0_26, %c0_27, %c0_28] : memref<1x8x4x8x8xf32, #tpu.memory_space<vmem>>, vector<1x1x4x8x8xf32>
    %65 = vector.shape_cast %64 : vector<1x1x4x8x8xf32> to vector<4x8x8xf32>
    %c0_29 = arith.constant 0 : index
    %c5 = arith.constant 5 : index
    %c0_30 = arith.constant 0 : index
    %c0_31 = arith.constant 0 : index
    %c0_32 = arith.constant 0 : index
    %66 = vector.load %arg2[%c0_29, %c5, %c0_30, %c0_31, %c0_32] : memref<1x8x4x8x8xf32, #tpu.memory_space<vmem>>, vector<1x1x4x8x8xf32>
    %67 = vector.shape_cast %66 : vector<1x1x4x8x8xf32> to vector<4x8x8xf32>
    %c0_33 = arith.constant 0 : index
    %c6 = arith.constant 6 : index
    %c0_34 = arith.constant 0 : index
    %c0_35 = arith.constant 0 : index
    %c0_36 = arith.constant 0 : index
    %68 = vector.load %arg2[%c0_33, %c6, %c0_34, %c0_35, %c0_36] : memref<1x8x4x8x8xf32, #tpu.memory_space<vmem>>, vector<1x1x4x8x8xf32>
    %69 = vector.shape_cast %68 : vector<1x1x4x8x8xf32> to vector<4x8x8xf32>
    %c0_37 = arith.constant 0 : index
    %c7 = arith.constant 7 : index
    %c0_38 = arith.constant 0 : index
    %c0_39 = arith.constant 0 : index
    %c0_40 = arith.constant 0 : index
    %70 = vector.load %arg2[%c0_37, %c7, %c0_38, %c0_39, %c0_40] : memref<1x8x4x8x8xf32, #tpu.memory_space<vmem>>, vector<1x1x4x8x8xf32>
    %71 = vector.shape_cast %70 : vector<1x1x4x8x8xf32> to vector<4x8x8xf32>
    %72 = vector.extract_strided_slice %0 {offsets = [1, 1, 1, 0, 0, 0], sizes = [1, 1, 1, 4, 1, 1], strides = [1, 1, 1, 1, 1, 1]} : vector<2x3x3x4x1x1xf32> to vector<1x1x1x4x1x1xf32>
    %73 = vector.shape_cast %72 : vector<1x1x1x4x1x1xf32> to vector<4x1x1xf32>
    %74 = vector.broadcast %73 : vector<4x1x1xf32> to vector<4x8x8xf32>
    %75 = arith.mulf %74, %65 : vector<4x8x8xf32>
    %76 = vector.extract_strided_slice %0 {offsets = [1, 1, 2, 0, 0, 0], sizes = [1, 1, 1, 4, 1, 1], strides = [1, 1, 1, 1, 1, 1]} : vector<2x3x3x4x1x1xf32> to vector<1x1x1x4x1x1xf32>
    %77 = vector.shape_cast %76 : vector<1x1x1x4x1x1xf32> to vector<4x1x1xf32>
    %78 = vector.broadcast %77 : vector<4x1x1xf32> to vector<4x8x8xf32>
    %79 = arith.mulf %78, %67 : vector<4x8x8xf32>
    %80 = arith.addf %75, %79 : vector<4x8x8xf32>
    %81 = vector.extract_strided_slice %0 {offsets = [1, 2, 1, 0, 0, 0], sizes = [1, 1, 1, 4, 1, 1], strides = [1, 1, 1, 1, 1, 1]} : vector<2x3x3x4x1x1xf32> to vector<1x1x1x4x1x1xf32>
    %82 = vector.shape_cast %81 : vector<1x1x1x4x1x1xf32> to vector<4x1x1xf32>
    %83 = vector.broadcast %82 : vector<4x1x1xf32> to vector<4x8x8xf32>
    %84 = arith.mulf %83, %69 : vector<4x8x8xf32>
    %85 = arith.addf %80, %84 : vector<4x8x8xf32>
    %86 = vector.extract_strided_slice %0 {offsets = [1, 2, 2, 0, 0, 0], sizes = [1, 1, 1, 4, 1, 1], strides = [1, 1, 1, 1, 1, 1]} : vector<2x3x3x4x1x1xf32> to vector<1x1x1x4x1x1xf32>
    %87 = vector.shape_cast %86 : vector<1x1x1x4x1x1xf32> to vector<4x1x1xf32>
    %88 = vector.broadcast %87 : vector<4x1x1xf32> to vector<4x8x8xf32>
    %89 = arith.mulf %88, %71 : vector<4x8x8xf32>
    %90 = arith.addf %85, %89 : vector<4x8x8xf32>
    %91 = arith.addf %63, %90 : vector<4x8x8xf32>
    %92 = vector.extract_strided_slice %0 {offsets = [1, 1, 0, 0, 0, 0], sizes = [1, 1, 1, 4, 1, 1], strides = [1, 1, 1, 1, 1, 1]} : vector<2x3x3x4x1x1xf32> to vector<1x1x1x4x1x1xf32>
    %93 = vector.shape_cast %92 : vector<1x1x1x4x1x1xf32> to vector<4x1x1xf32>
    %94 = vector.broadcast %93 : vector<4x1x1xf32> to vector<4x8x8xf32>
    %95 = arith.mulf %94, %67 : vector<4x8x8xf32>
    %96 = vector.extract_strided_slice %0 {offsets = [1, 2, 0, 0, 0, 0], sizes = [1, 1, 1, 4, 1, 1], strides = [1, 1, 1, 1, 1, 1]} : vector<2x3x3x4x1x1xf32> to vector<1x1x1x4x1x1xf32>
    %97 = vector.shape_cast %96 : vector<1x1x1x4x1x1xf32> to vector<4x1x1xf32>
    %98 = vector.broadcast %97 : vector<4x1x1xf32> to vector<4x8x8xf32>
    %99 = arith.mulf %98, %71 : vector<4x8x8xf32>
    %100 = arith.addf %95, %99 : vector<4x8x8xf32>
    %cst_41 = arith.constant 0.000000e+00 : f32
    %101 = vector.broadcast %cst_41 : f32 to vector<4x8x1xf32>
    %102 = vector.extract_strided_slice %100 {offsets = [0, 0, 0], sizes = [4, 8, 7], strides = [1, 1, 1]} : vector<4x8x8xf32> to vector<4x8x7xf32>
    %103 = tpu.concatenate %101, %102 in 2 : vector<4x8x1xf32>, vector<4x8x7xf32> -> vector<4x8x8xf32>
    %104 = arith.addf %91, %103 : vector<4x8x8xf32>
    %105 = vector.extract_strided_slice %0 {offsets = [1, 0, 1, 0, 0, 0], sizes = [1, 1, 1, 4, 1, 1], strides = [1, 1, 1, 1, 1, 1]} : vector<2x3x3x4x1x1xf32> to vector<1x1x1x4x1x1xf32>
    %106 = vector.shape_cast %105 : vector<1x1x1x4x1x1xf32> to vector<4x1x1xf32>
    %107 = vector.broadcast %106 : vector<4x1x1xf32> to vector<4x8x8xf32>
    %108 = arith.mulf %107, %69 : vector<4x8x8xf32>
    %109 = vector.extract_strided_slice %0 {offsets = [1, 0, 2, 0, 0, 0], sizes = [1, 1, 1, 4, 1, 1], strides = [1, 1, 1, 1, 1, 1]} : vector<2x3x3x4x1x1xf32> to vector<1x1x1x4x1x1xf32>
    %110 = vector.shape_cast %109 : vector<1x1x1x4x1x1xf32> to vector<4x1x1xf32>
    %111 = vector.broadcast %110 : vector<4x1x1xf32> to vector<4x8x8xf32>
    %112 = arith.mulf %111, %71 : vector<4x8x8xf32>
    %113 = arith.addf %108, %112 : vector<4x8x8xf32>
    %114 = vector.extract_strided_slice %0 {offsets = [1, 0, 0, 0, 0, 0], sizes = [1, 1, 1, 4, 1, 1], strides = [1, 1, 1, 1, 1, 1]} : vector<2x3x3x4x1x1xf32> to vector<1x1x1x4x1x1xf32>
    %115 = vector.shape_cast %114 : vector<1x1x1x4x1x1xf32> to vector<4x1x1xf32>
    %116 = vector.broadcast %115 : vector<4x1x1xf32> to vector<4x8x8xf32>
    %117 = arith.mulf %116, %71 : vector<4x8x8xf32>
    %cst_42 = arith.constant 0.000000e+00 : f32
    %118 = vector.broadcast %cst_42 : f32 to vector<4x8x1xf32>
    %119 = vector.extract_strided_slice %117 {offsets = [0, 0, 0], sizes = [4, 8, 7], strides = [1, 1, 1]} : vector<4x8x8xf32> to vector<4x8x7xf32>
    %120 = tpu.concatenate %118, %119 in 2 : vector<4x8x1xf32>, vector<4x8x7xf32> -> vector<4x8x8xf32>
    %121 = arith.addf %113, %120 : vector<4x8x8xf32>
    %cst_43 = arith.constant 0.000000e+00 : f32
    %122 = vector.broadcast %cst_43 : f32 to vector<4x1x8xf32>
    %123 = vector.extract_strided_slice %121 {offsets = [0, 0, 0], sizes = [4, 7, 8], strides = [1, 1, 1]} : vector<4x8x8xf32> to vector<4x7x8xf32>
    %124 = tpu.concatenate %122, %123 in 1 : vector<4x1x8xf32>, vector<4x7x8xf32> -> vector<4x8x8xf32>
    %125 = arith.addf %104, %124 : vector<4x8x8xf32>
    %c0_44 = arith.constant 0 : index
    %c0_45 = arith.constant 0 : index
    %c0_46 = arith.constant 0 : index
    %c0_47 = arith.constant 0 : index
    %126 = vector.load %arg4[%c0_44, %c0_45, %c0_46, %c0_47] : memref<1x4x8x8xf32, #tpu.memory_space<vmem>>, vector<1x4x8x8xf32>
    %127 = vector.shape_cast %126 : vector<1x4x8x8xf32> to vector<4x8x8xf32>
    %128 = vector.shape_cast %125 : vector<4x8x8xf32> to vector<1x4x8x8xf32>
    tpu.vector_store %arg4[%c0_44, %c0_45, %c0_46, %c0_47], %128 {strides = array<i32>} : memref<1x4x8x8xf32, #tpu.memory_space<vmem>>, vector<1x4x8x8xf32>,
    return
  }
  func.func @transform_0(%arg0: i32, %arg1: i32) -> (i32, i32, i32, i32, i32) {
    %c0_i32 = arith.constant 0 : i32
    %c0_i32_0 = arith.constant 0 : i32
    %c0_i32_1 = arith.constant 0 : i32
    %c0_i32_2 = arith.constant 0 : i32
    return %arg0, %c0_i32, %arg1, %c0_i32_0, %c0_i32_1 : i32, i32, i32, i32, i32
  }
  func.func @transform_1(%arg0: i32, %arg1: i32) -> (i32, i32, i32, i32, i32, i32) {
    %c0_i32 = arith.constant 0 : i32
    %c0_i32_0 = arith.constant 0 : i32
    %c0_i32_1 = arith.constant 0 : i32
    %c0_i32_2 = arith.constant 0 : i32
    %c0_i32_3 = arith.constant 0 : i32
    %c0_i32_4 = arith.constant 0 : i32
    return %c0_i32, %c0_i32_0, %c0_i32_1, %arg1, %c0_i32_2, %c0_i32_3 : i32, i32, i32, i32, i32, i32
  }
  func.func @transform_2(%arg0: i32, %arg1: i32) -> (i32, i32, i32, i32) {
    %c0_i32 = arith.constant 0 : i32
    %c0_i32_0 = arith.constant 0 : i32
    %c0_i32_1 = arith.constant 0 : i32
    return %arg0, %arg1, %c0_i32, %c0_i32_0 : i32, i32, i32, i32
  }
}

module attributes {stable_mosaic.version = 11 : i64} {
  func.func @_cluster_mean_kernel(%arg0: i32, %arg1: i32, %arg2: memref<2x4xf32, #tpu.memory_space<vmem>>, %arg3: memref<1x4x64xf32, #tpu.memory_space<vmem>>, %arg4: memref<1x2x64xf32, #tpu.memory_space<vmem>>) attributes {dimension_semantics = [#tpu.dimension_semantics<parallel>, #tpu.dimension_semantics<parallel>], iteration_bounds = array<i64: 2, 1>, scalar_prefetch = 0 : i64, scratch_operands = 0 : i64, tpu.core_type = #tpu.core_type<tc>, window_params = [{pipeline_mode = #tpu.pipeline_mode<synchronous>, transform_indices = @transform_0, window_bounds = array<i64: 2, 4>}, {transform_indices = @transform_1, window_bounds = array<i64: 1, 4, 64>}, {transform_indices = @transform_2, window_bounds = array<i64: 1, 2, 64>}]} {
    %c0 = arith.constant 0 : index
    %c0_0 = arith.constant 0 : index
    %0 = vector.load %arg2[%c0, %c0_0] : memref<2x4xf32, #tpu.memory_space<vmem>>, vector<2x4xf32>
    %c0_1 = arith.constant 0 : index
    %c0_2 = arith.constant 0 : index
    %c0_3 = arith.constant 0 : index
    %1 = vector.load %arg3[%c0_1, %c0_2, %c0_3] : memref<1x4x64xf32, #tpu.memory_space<vmem>>, vector<1x4x64xf32>
    %2 = vector.shape_cast %1 : vector<1x4x64xf32> to vector<4x64xf32>
    %cst = arith.constant dense<0.000000e+00> : vector<2x64xf32>
    %3 = tpu.matmul %0, %2, %cst {dimension_numbers = #tpu.dot_dimension_numbers<[1], [0], [0], [1], [0, 0, 1, 1], [], []>} : vector<2x4xf32>, vector<4x64xf32>, vector<2x64xf32> -> vector<2x64xf32>
    %c0_4 = arith.constant 0 : index
    %c0_5 = arith.constant 0 : index
    %c0_6 = arith.constant 0 : index
    %4 = vector.load %arg4[%c0_4, %c0_5, %c0_6] : memref<1x2x64xf32, #tpu.memory_space<vmem>>, vector<1x2x64xf32>
    %5 = vector.shape_cast %4 : vector<1x2x64xf32> to vector<2x64xf32>
    %6 = vector.shape_cast %3 : vector<2x64xf32> to vector<1x2x64xf32>
    tpu.vector_store %arg4[%c0_4, %c0_5, %c0_6], %6 {strides = array<i32>} : memref<1x2x64xf32, #tpu.memory_space<vmem>>, vector<1x2x64xf32>,
    return
  }
  func.func @transform_0(%arg0: i32, %arg1: i32) -> (i32, i32) {
    %c0_i32 = arith.constant 0 : i32
    %c0_i32_0 = arith.constant 0 : i32
    %c0_i32_1 = arith.constant 0 : i32
    return %c0_i32, %c0_i32_0 : i32, i32
  }
  func.func @transform_1(%arg0: i32, %arg1: i32) -> (i32, i32, i32) {
    %c0_i32 = arith.constant 0 : i32
    %c0_i32_0 = arith.constant 0 : i32
    return %arg0, %c0_i32, %arg1 : i32, i32, i32
  }
  func.func @transform_2(%arg0: i32, %arg1: i32) -> (i32, i32, i32) {
    %c0_i32 = arith.constant 0 : i32
    %c0_i32_0 = arith.constant 0 : i32
    return %arg0, %c0_i32, %arg1 : i32, i32, i32
  }
}

module attributes {stable_mosaic.version = 11 : i64} {
  func.func @_fuse_kernel(%arg0: i32, %arg1: i32, %arg2: memref<2x8xf32, #tpu.memory_space<smem>>, %arg3: memref<1x4x8x8xf32, #tpu.memory_space<vmem>>, %arg4: memref<16x8xf32, #tpu.memory_space<vmem>>, %arg5: memref<8x16xf32, #tpu.memory_space<vmem>>, %arg6: memref<1x8x16x16xf32, #tpu.memory_space<vmem>>, %arg7: memref<1x8x16x16xf32, #tpu.memory_space<vmem>>) attributes {dimension_semantics = [#tpu.dimension_semantics<parallel>, #tpu.dimension_semantics<parallel>], iteration_bounds = array<i64: 2, 1>, scalar_prefetch = 0 : i64, scratch_operands = 0 : i64, tpu.core_type = #tpu.core_type<tc>, window_params = [{transform_indices = @transform_0, window_bounds = array<i64: 2, 8>}, {transform_indices = @transform_1, window_bounds = array<i64: 1, 4, 8, 8>}, {transform_indices = @transform_2, window_bounds = array<i64: 16, 8>}, {pipeline_mode = #tpu.pipeline_mode<synchronous>, transform_indices = @transform_3, window_bounds = array<i64: 8, 16>}, {transform_indices = @transform_4, window_bounds = array<i64: 1, 8, 16, 16>}, {transform_indices = @transform_5, window_bounds = array<i64: 1, 8, 16, 16>}]} {
    %c0 = arith.constant 0 : index
    %c0_0 = arith.constant 0 : index
    %0 = vector.load %arg4[%c0, %c0_0] : memref<16x8xf32, #tpu.memory_space<vmem>>, vector<16x8xf32>
    %c0_1 = arith.constant 0 : index
    %c0_2 = arith.constant 0 : index
    %1 = vector.load %arg5[%c0_1, %c0_2] : memref<8x16xf32, #tpu.memory_space<vmem>>, vector<8x16xf32>
    %c0_3 = arith.constant 0 : index
    %c0_4 = arith.constant 0 : index
    %c0_5 = arith.constant 0 : index
    %c0_6 = arith.constant 0 : index
    %2 = vector.load %arg3[%c0_3, %c0_4, %c0_5, %c0_6] : memref<1x4x8x8xf32, #tpu.memory_space<vmem>>, vector<1x1x8x8xf32>
    %3 = vector.shape_cast %2 : vector<1x1x8x8xf32> to vector<8x8xf32>
    %cst = arith.constant dense<0.000000e+00> : vector<16x8xf32>
    %4 = tpu.matmul %0, %3, %cst {dimension_numbers = #tpu.dot_dimension_numbers<[1], [0], [0], [1], [0, 0, 1, 1], [], []>} : vector<16x8xf32>, vector<8x8xf32>, vector<16x8xf32> -> vector<16x8xf32>
    %cst_7 = arith.constant dense<0.000000e+00> : vector<16x16xf32>
    %5 = tpu.matmul %4, %1, %cst_7 {dimension_numbers = #tpu.dot_dimension_numbers<[1], [0], [0], [1], [0, 0, 1, 1], [], []>} : vector<16x8xf32>, vector<8x16xf32>, vector<16x16xf32> -> vector<16x16xf32>
    %6 = arith.index_cast %arg0 : i32 to index
    %c0_8 = arith.constant 0 : index
    %7 = memref.load %arg2[%6, %c0_8] : memref<2x8xf32, #tpu.memory_space<smem>>
    %8 = vector.broadcast %7 : f32 to vector<16x16xf32>
    %9 = arith.mulf %8, %5 : vector<16x16xf32>
    %c0_9 = arith.constant 0 : index
    %c0_10 = arith.constant 0 : index
    %c0_11 = arith.constant 0 : index
    %c0_12 = arith.constant 0 : index
    %10 = vector.load %arg6[%c0_9, %c0_10, %c0_11, %c0_12] : memref<1x8x16x16xf32, #tpu.memory_space<vmem>>, vector<1x1x16x16xf32>
    %11 = vector.shape_cast %10 : vector<1x1x16x16xf32> to vector<16x16xf32>
    %12 = arith.addf %9, %11 : vector<16x16xf32>
    %c0_13 = arith.constant 0 : index
    %c0_14 = arith.constant 0 : index
    %c0_15 = arith.constant 0 : index
    %c0_16 = arith.constant 0 : index
    %13 = vector.load %arg7[%c0_13, %c0_14, %c0_15, %c0_16] : memref<1x8x16x16xf32, #tpu.memory_space<vmem>>, vector<1x1x16x16xf32>
    %14 = vector.shape_cast %13 : vector<1x1x16x16xf32> to vector<16x16xf32>
    %15 = vector.shape_cast %12 : vector<16x16xf32> to vector<1x1x16x16xf32>
    tpu.vector_store %arg7[%c0_13, %c0_14, %c0_15, %c0_16], %15 {strides = array<i32>} : memref<1x8x16x16xf32, #tpu.memory_space<vmem>>, vector<1x1x16x16xf32>,
    %16 = arith.index_cast %arg0 : i32 to index
    %c1 = arith.constant 1 : index
    %17 = memref.load %arg2[%16, %c1] : memref<2x8xf32, #tpu.memory_space<smem>>
    %18 = vector.broadcast %17 : f32 to vector<16x16xf32>
    %19 = arith.mulf %18, %5 : vector<16x16xf32>
    %c0_17 = arith.constant 0 : index
    %c1_18 = arith.constant 1 : index
    %c0_19 = arith.constant 0 : index
    %c0_20 = arith.constant 0 : index
    %20 = vector.load %arg6[%c0_17, %c1_18, %c0_19, %c0_20] : memref<1x8x16x16xf32, #tpu.memory_space<vmem>>, vector<1x1x16x16xf32>
    %21 = vector.shape_cast %20 : vector<1x1x16x16xf32> to vector<16x16xf32>
    %22 = arith.addf %19, %21 : vector<16x16xf32>
    %c0_21 = arith.constant 0 : index
    %c1_22 = arith.constant 1 : index
    %c0_23 = arith.constant 0 : index
    %c0_24 = arith.constant 0 : index
    %23 = vector.load %arg7[%c0_21, %c1_22, %c0_23, %c0_24] : memref<1x8x16x16xf32, #tpu.memory_space<vmem>>, vector<1x1x16x16xf32>
    %24 = vector.shape_cast %23 : vector<1x1x16x16xf32> to vector<16x16xf32>
    %25 = vector.shape_cast %22 : vector<16x16xf32> to vector<1x1x16x16xf32>
    tpu.vector_store %arg7[%c0_21, %c1_22, %c0_23, %c0_24], %25 {strides = array<i32>} : memref<1x8x16x16xf32, #tpu.memory_space<vmem>>, vector<1x1x16x16xf32>,
    %c0_25 = arith.constant 0 : index
    %c1_26 = arith.constant 1 : index
    %c0_27 = arith.constant 0 : index
    %c0_28 = arith.constant 0 : index
    %26 = vector.load %arg3[%c0_25, %c1_26, %c0_27, %c0_28] : memref<1x4x8x8xf32, #tpu.memory_space<vmem>>, vector<1x1x8x8xf32>
    %27 = vector.shape_cast %26 : vector<1x1x8x8xf32> to vector<8x8xf32>
    %cst_29 = arith.constant dense<0.000000e+00> : vector<16x8xf32>
    %28 = tpu.matmul %0, %27, %cst_29 {dimension_numbers = #tpu.dot_dimension_numbers<[1], [0], [0], [1], [0, 0, 1, 1], [], []>} : vector<16x8xf32>, vector<8x8xf32>, vector<16x8xf32> -> vector<16x8xf32>
    %cst_30 = arith.constant dense<0.000000e+00> : vector<16x16xf32>
    %29 = tpu.matmul %28, %1, %cst_30 {dimension_numbers = #tpu.dot_dimension_numbers<[1], [0], [0], [1], [0, 0, 1, 1], [], []>} : vector<16x8xf32>, vector<8x16xf32>, vector<16x16xf32> -> vector<16x16xf32>
    %30 = arith.index_cast %arg0 : i32 to index
    %c2 = arith.constant 2 : index
    %31 = memref.load %arg2[%30, %c2] : memref<2x8xf32, #tpu.memory_space<smem>>
    %32 = vector.broadcast %31 : f32 to vector<16x16xf32>
    %33 = arith.mulf %32, %29 : vector<16x16xf32>
    %c0_31 = arith.constant 0 : index
    %c2_32 = arith.constant 2 : index
    %c0_33 = arith.constant 0 : index
    %c0_34 = arith.constant 0 : index
    %34 = vector.load %arg6[%c0_31, %c2_32, %c0_33, %c0_34] : memref<1x8x16x16xf32, #tpu.memory_space<vmem>>, vector<1x1x16x16xf32>
    %35 = vector.shape_cast %34 : vector<1x1x16x16xf32> to vector<16x16xf32>
    %36 = arith.addf %33, %35 : vector<16x16xf32>
    %c0_35 = arith.constant 0 : index
    %c2_36 = arith.constant 2 : index
    %c0_37 = arith.constant 0 : index
    %c0_38 = arith.constant 0 : index
    %37 = vector.load %arg7[%c0_35, %c2_36, %c0_37, %c0_38] : memref<1x8x16x16xf32, #tpu.memory_space<vmem>>, vector<1x1x16x16xf32>
    %38 = vector.shape_cast %37 : vector<1x1x16x16xf32> to vector<16x16xf32>
    %39 = vector.shape_cast %36 : vector<16x16xf32> to vector<1x1x16x16xf32>
    tpu.vector_store %arg7[%c0_35, %c2_36, %c0_37, %c0_38], %39 {strides = array<i32>} : memref<1x8x16x16xf32, #tpu.memory_space<vmem>>, vector<1x1x16x16xf32>,
    %40 = arith.index_cast %arg0 : i32 to index
    %c3 = arith.constant 3 : index
    %41 = memref.load %arg2[%40, %c3] : memref<2x8xf32, #tpu.memory_space<smem>>
    %42 = vector.broadcast %41 : f32 to vector<16x16xf32>
    %43 = arith.mulf %42, %29 : vector<16x16xf32>
    %c0_39 = arith.constant 0 : index
    %c3_40 = arith.constant 3 : index
    %c0_41 = arith.constant 0 : index
    %c0_42 = arith.constant 0 : index
    %44 = vector.load %arg6[%c0_39, %c3_40, %c0_41, %c0_42] : memref<1x8x16x16xf32, #tpu.memory_space<vmem>>, vector<1x1x16x16xf32>
    %45 = vector.shape_cast %44 : vector<1x1x16x16xf32> to vector<16x16xf32>
    %46 = arith.addf %43, %45 : vector<16x16xf32>
    %c0_43 = arith.constant 0 : index
    %c3_44 = arith.constant 3 : index
    %c0_45 = arith.constant 0 : index
    %c0_46 = arith.constant 0 : index
    %47 = vector.load %arg7[%c0_43, %c3_44, %c0_45, %c0_46] : memref<1x8x16x16xf32, #tpu.memory_space<vmem>>, vector<1x1x16x16xf32>
    %48 = vector.shape_cast %47 : vector<1x1x16x16xf32> to vector<16x16xf32>
    %49 = vector.shape_cast %46 : vector<16x16xf32> to vector<1x1x16x16xf32>
    tpu.vector_store %arg7[%c0_43, %c3_44, %c0_45, %c0_46], %49 {strides = array<i32>} : memref<1x8x16x16xf32, #tpu.memory_space<vmem>>, vector<1x1x16x16xf32>,
    %c0_47 = arith.constant 0 : index
    %c2_48 = arith.constant 2 : index
    %c0_49 = arith.constant 0 : index
    %c0_50 = arith.constant 0 : index
    %50 = vector.load %arg3[%c0_47, %c2_48, %c0_49, %c0_50] : memref<1x4x8x8xf32, #tpu.memory_space<vmem>>, vector<1x1x8x8xf32>
    %51 = vector.shape_cast %50 : vector<1x1x8x8xf32> to vector<8x8xf32>
    %cst_51 = arith.constant dense<0.000000e+00> : vector<16x8xf32>
    %52 = tpu.matmul %0, %51, %cst_51 {dimension_numbers = #tpu.dot_dimension_numbers<[1], [0], [0], [1], [0, 0, 1, 1], [], []>} : vector<16x8xf32>, vector<8x8xf32>, vector<16x8xf32> -> vector<16x8xf32>
    %cst_52 = arith.constant dense<0.000000e+00> : vector<16x16xf32>
    %53 = tpu.matmul %52, %1, %cst_52 {dimension_numbers = #tpu.dot_dimension_numbers<[1], [0], [0], [1], [0, 0, 1, 1], [], []>} : vector<16x8xf32>, vector<8x16xf32>, vector<16x16xf32> -> vector<16x16xf32>
    %54 = arith.index_cast %arg0 : i32 to index
    %c4 = arith.constant 4 : index
    %55 = memref.load %arg2[%54, %c4] : memref<2x8xf32, #tpu.memory_space<smem>>
    %56 = vector.broadcast %55 : f32 to vector<16x16xf32>
    %57 = arith.mulf %56, %53 : vector<16x16xf32>
    %c0_53 = arith.constant 0 : index
    %c4_54 = arith.constant 4 : index
    %c0_55 = arith.constant 0 : index
    %c0_56 = arith.constant 0 : index
    %58 = vector.load %arg6[%c0_53, %c4_54, %c0_55, %c0_56] : memref<1x8x16x16xf32, #tpu.memory_space<vmem>>, vector<1x1x16x16xf32>
    %59 = vector.shape_cast %58 : vector<1x1x16x16xf32> to vector<16x16xf32>
    %60 = arith.addf %57, %59 : vector<16x16xf32>
    %c0_57 = arith.constant 0 : index
    %c4_58 = arith.constant 4 : index
    %c0_59 = arith.constant 0 : index
    %c0_60 = arith.constant 0 : index
    %61 = vector.load %arg7[%c0_57, %c4_58, %c0_59, %c0_60] : memref<1x8x16x16xf32, #tpu.memory_space<vmem>>, vector<1x1x16x16xf32>
    %62 = vector.shape_cast %61 : vector<1x1x16x16xf32> to vector<16x16xf32>
    %63 = vector.shape_cast %60 : vector<16x16xf32> to vector<1x1x16x16xf32>
    tpu.vector_store %arg7[%c0_57, %c4_58, %c0_59, %c0_60], %63 {strides = array<i32>} : memref<1x8x16x16xf32, #tpu.memory_space<vmem>>, vector<1x1x16x16xf32>,
    %64 = arith.index_cast %arg0 : i32 to index
    %c5 = arith.constant 5 : index
    %65 = memref.load %arg2[%64, %c5] : memref<2x8xf32, #tpu.memory_space<smem>>
    %66 = vector.broadcast %65 : f32 to vector<16x16xf32>
    %67 = arith.mulf %66, %53 : vector<16x16xf32>
    %c0_61 = arith.constant 0 : index
    %c5_62 = arith.constant 5 : index
    %c0_63 = arith.constant 0 : index
    %c0_64 = arith.constant 0 : index
    %68 = vector.load %arg6[%c0_61, %c5_62, %c0_63, %c0_64] : memref<1x8x16x16xf32, #tpu.memory_space<vmem>>, vector<1x1x16x16xf32>
    %69 = vector.shape_cast %68 : vector<1x1x16x16xf32> to vector<16x16xf32>
    %70 = arith.addf %67, %69 : vector<16x16xf32>
    %c0_65 = arith.constant 0 : index
    %c5_66 = arith.constant 5 : index
    %c0_67 = arith.constant 0 : index
    %c0_68 = arith.constant 0 : index
    %71 = vector.load %arg7[%c0_65, %c5_66, %c0_67, %c0_68] : memref<1x8x16x16xf32, #tpu.memory_space<vmem>>, vector<1x1x16x16xf32>
    %72 = vector.shape_cast %71 : vector<1x1x16x16xf32> to vector<16x16xf32>
    %73 = vector.shape_cast %70 : vector<16x16xf32> to vector<1x1x16x16xf32>
    tpu.vector_store %arg7[%c0_65, %c5_66, %c0_67, %c0_68], %73 {strides = array<i32>} : memref<1x8x16x16xf32, #tpu.memory_space<vmem>>, vector<1x1x16x16xf32>,
    %c0_69 = arith.constant 0 : index
    %c3_70 = arith.constant 3 : index
    %c0_71 = arith.constant 0 : index
    %c0_72 = arith.constant 0 : index
    %74 = vector.load %arg3[%c0_69, %c3_70, %c0_71, %c0_72] : memref<1x4x8x8xf32, #tpu.memory_space<vmem>>, vector<1x1x8x8xf32>
    %75 = vector.shape_cast %74 : vector<1x1x8x8xf32> to vector<8x8xf32>
    %cst_73 = arith.constant dense<0.000000e+00> : vector<16x8xf32>
    %76 = tpu.matmul %0, %75, %cst_73 {dimension_numbers = #tpu.dot_dimension_numbers<[1], [0], [0], [1], [0, 0, 1, 1], [], []>} : vector<16x8xf32>, vector<8x8xf32>, vector<16x8xf32> -> vector<16x8xf32>
    %cst_74 = arith.constant dense<0.000000e+00> : vector<16x16xf32>
    %77 = tpu.matmul %76, %1, %cst_74 {dimension_numbers = #tpu.dot_dimension_numbers<[1], [0], [0], [1], [0, 0, 1, 1], [], []>} : vector<16x8xf32>, vector<8x16xf32>, vector<16x16xf32> -> vector<16x16xf32>
    %78 = arith.index_cast %arg0 : i32 to index
    %c6 = arith.constant 6 : index
    %79 = memref.load %arg2[%78, %c6] : memref<2x8xf32, #tpu.memory_space<smem>>
    %80 = vector.broadcast %79 : f32 to vector<16x16xf32>
    %81 = arith.mulf %80, %77 : vector<16x16xf32>
    %c0_75 = arith.constant 0 : index
    %c6_76 = arith.constant 6 : index
    %c0_77 = arith.constant 0 : index
    %c0_78 = arith.constant 0 : index
    %82 = vector.load %arg6[%c0_75, %c6_76, %c0_77, %c0_78] : memref<1x8x16x16xf32, #tpu.memory_space<vmem>>, vector<1x1x16x16xf32>
    %83 = vector.shape_cast %82 : vector<1x1x16x16xf32> to vector<16x16xf32>
    %84 = arith.addf %81, %83 : vector<16x16xf32>
    %c0_79 = arith.constant 0 : index
    %c6_80 = arith.constant 6 : index
    %c0_81 = arith.constant 0 : index
    %c0_82 = arith.constant 0 : index
    %85 = vector.load %arg7[%c0_79, %c6_80, %c0_81, %c0_82] : memref<1x8x16x16xf32, #tpu.memory_space<vmem>>, vector<1x1x16x16xf32>
    %86 = vector.shape_cast %85 : vector<1x1x16x16xf32> to vector<16x16xf32>
    %87 = vector.shape_cast %84 : vector<16x16xf32> to vector<1x1x16x16xf32>
    tpu.vector_store %arg7[%c0_79, %c6_80, %c0_81, %c0_82], %87 {strides = array<i32>} : memref<1x8x16x16xf32, #tpu.memory_space<vmem>>, vector<1x1x16x16xf32>,
    %88 = arith.index_cast %arg0 : i32 to index
    %c7 = arith.constant 7 : index
    %89 = memref.load %arg2[%88, %c7] : memref<2x8xf32, #tpu.memory_space<smem>>
    %90 = vector.broadcast %89 : f32 to vector<16x16xf32>
    %91 = arith.mulf %90, %77 : vector<16x16xf32>
    %c0_83 = arith.constant 0 : index
    %c7_84 = arith.constant 7 : index
    %c0_85 = arith.constant 0 : index
    %c0_86 = arith.constant 0 : index
    %92 = vector.load %arg6[%c0_83, %c7_84, %c0_85, %c0_86] : memref<1x8x16x16xf32, #tpu.memory_space<vmem>>, vector<1x1x16x16xf32>
    %93 = vector.shape_cast %92 : vector<1x1x16x16xf32> to vector<16x16xf32>
    %94 = arith.addf %91, %93 : vector<16x16xf32>
    %c0_87 = arith.constant 0 : index
    %c7_88 = arith.constant 7 : index
    %c0_89 = arith.constant 0 : index
    %c0_90 = arith.constant 0 : index
    %95 = vector.load %arg7[%c0_87, %c7_88, %c0_89, %c0_90] : memref<1x8x16x16xf32, #tpu.memory_space<vmem>>, vector<1x1x16x16xf32>
    %96 = vector.shape_cast %95 : vector<1x1x16x16xf32> to vector<16x16xf32>
    %97 = vector.shape_cast %94 : vector<16x16xf32> to vector<1x1x16x16xf32>
    tpu.vector_store %arg7[%c0_87, %c7_88, %c0_89, %c0_90], %97 {strides = array<i32>} : memref<1x8x16x16xf32, #tpu.memory_space<vmem>>, vector<1x1x16x16xf32>,
    return
  }
  func.func @transform_0(%arg0: i32, %arg1: i32) -> (i32, i32) {
    %c0_i32 = arith.constant 0 : i32
    %c0_i32_0 = arith.constant 0 : i32
    %c0_i32_1 = arith.constant 0 : i32
    return %c0_i32, %c0_i32_0 : i32, i32
  }
  func.func @transform_1(%arg0: i32, %arg1: i32) -> (i32, i32, i32, i32) {
    %c0_i32 = arith.constant 0 : i32
    %c0_i32_0 = arith.constant 0 : i32
    %c0_i32_1 = arith.constant 0 : i32
    %c0_i32_2 = arith.constant 0 : i32
    return %arg0, %c0_i32, %c0_i32_0, %c0_i32_1 : i32, i32, i32, i32
  }
  func.func @transform_2(%arg0: i32, %arg1: i32) -> (i32, i32) {
    %c0_i32 = arith.constant 0 : i32
    %c0_i32_0 = arith.constant 0 : i32
    return %arg1, %c0_i32 : i32, i32
  }
  func.func @transform_3(%arg0: i32, %arg1: i32) -> (i32, i32) {
    %c0_i32 = arith.constant 0 : i32
    %c0_i32_0 = arith.constant 0 : i32
    %c0_i32_1 = arith.constant 0 : i32
    return %c0_i32, %c0_i32_0 : i32, i32
  }
  func.func @transform_4(%arg0: i32, %arg1: i32) -> (i32, i32, i32, i32) {
    %c0_i32 = arith.constant 0 : i32
    %c0_i32_0 = arith.constant 0 : i32
    %c0_i32_1 = arith.constant 0 : i32
    return %arg0, %c0_i32, %arg1, %c0_i32_0 : i32, i32, i32, i32
  }
  func.func @transform_5(%arg0: i32, %arg1: i32) -> (i32, i32, i32, i32) {
    %c0_i32 = arith.constant 0 : i32
    %c0_i32_0 = arith.constant 0 : i32
    %c0_i32_1 = arith.constant 0 : i32
    return %arg0, %c0_i32, %arg1, %c0_i32_0 : i32, i32, i32, i32
  }
}

</mosaic_0001>

<llo_original>
// kernel: ucoea_forward.3
$region0: #{ucoea_forward.3}
  #allocation0 [shape = 'u32[]', space=smem, size = 0x4, offset = 0x4, fixed_abs, tag = 'smem constant byte address 0x4 - core index']
  #allocation1 [shape = 'u32[72,128]{1,0:T(1,128)}', space=vmem, size = 0x9000, scoped, tag = 'internal scratch']
  %s0 = inlined_call_operand.vmem [shape: f32[2,8,4,8,8], index: 0, kind: input, shape index: {}]
  %s1 = inlined_call_operand.vmem [shape: f32[2,3,3,4,1,1], index: 1, kind: input, shape index: {}]
  %s2 = inlined_call_operand.vmem [shape: f32[2,4,8,8], index: 2, kind: output, shape index: {}]
  %s3 = sld [smem:[#allocation0]]
  $region41: #{ucoea_forward.3} parent=0
    _
  %s5 = ssub.s32 1, %s3
  %s6 = scalar_select 0, %s5, %s3
  loop: start=0, step=1, limit=4
  $region2: #{ucoea_forward.3} parent=0 // loop_pre_header
    _
  $region3: #{ucoea_forward.3} parent=0 // loop_header
    %s8 = sphi 0, %s12
    %p9 = scmp.ge.s32.totalorder %s8, 4
    %s15 = sphi 0, %s27
    %s16 = sphi 0, %s23
    %s17 = sphi 0, %s15
    %s18 = sphi 0, %s16
    %s19 = sphi 0, %s17
    %s20 = sphi 0, %s18
    %s32 = sphi 0, %s34
    %s35 = sphi 0, %s32
    %s36 = sphi 0, %s35
    %s52 = sphi 0, %s36
    %s58 = sphi 0, %s60
    %s61 = sphi 0, %s58
    %s62 = sphi 0, %s61
    %s78 = sphi 0, %s62
    %s86 = sphi 0, %s88
    %s89 = sphi 0, %s86
    %s90 = sphi 0, %s89
    %s106 = sphi 0, %s90
  $region4: #{ucoea_forward.3} parent=0 // loop_header_branch
    %11 = sbr.rel (%p9) target = $region8
  $region5: #{ucoea_forward.3} parent=0 // loop_body
    %s13 = ssub.s32 %s8, 1
    %s14 = ssub.s32 %s8, 2
    %s21 = sadd.s32 1, %s16
    %p22 = scmp.ge.s32.totalorder %s21, 1
    %s23 = scalar_select %p22, 0, %s21
    %s24 = sadd.s32 1, %s15
    %s25 = scalar_select %p22, %s24, %s15
    %p26 = scmp.ge.s32.totalorder %s25, 2
    %s27 = scalar_select %p26, 0, %s25
    %s28 = ssub.s32 %s15, %s27
    %s29 = ssub.s32 %s16, %s23
    %s30 = sor.u32 %s28, %s29
    %p31 = scmp.eq.s32.totalorder %s30, 0
    %s33 = sadd.s32 %s32, 1
    %s34 = scalar_select %p31, %s32, %s33
    %p37 = pneg %p31
    %p38 = scmp.eq.s32.totalorder %s8, 1
    %p39 = por %p37, %p38
    %p40 = scmp.ne.s32.totalorder %s32, %s35
    %p41 = scmp.eq.s32.totalorder %s8, 0
    %p42 = por %p40, %p41
    %p43 = scmp.ne.s32.totalorder %s32, %s35
    %p44 = scmp.eq.s32.totalorder %s13, 1
    %p45 = por %p43, %p44
    %p46 = scmp.ne.s32.totalorder %s35, %s36
    %p47 = scmp.eq.s32.totalorder %s13, 0
    %p48 = por %p46, %p47
    %p49 = scmp.ne.s32.totalorder %s35, %s36
    %p50 = scmp.eq.s32.totalorder %s14, 1
    %p51 = por %p49, %p50
    %p53 = scmp.ne.s32.totalorder %s36, %s52
    %p54 = scmp.eq.s32.totalorder %s14, 0
    %p55 = por %p53, %p54
    %s56 = ssub.s32 %s16, %s23
    %p57 = scmp.eq.s32.totalorder %s56, 0
    %s59 = sadd.s32 %s58, 1
    %s60 = scalar_select %p57, %s58, %s59
    %p63 = pneg %p57
    %p64 = scmp.eq.s32.totalorder %s8, 1
    %p65 = por %p63, %p64
    %p66 = scmp.ne.s32.totalorder %s58, %s61
    %p67 = scmp.eq.s32.totalorder %s8, 0
    %p68 = por %p66, %p67
    %p69 = scmp.ne.s32.totalorder %s58, %s61
    %p70 = scmp.eq.s32.totalorder %s13, 1
    %p71 = por %p69, %p70
    %p72 = scmp.ne.s32.totalorder %s61, %s62
    %p73 = scmp.eq.s32.totalorder %s13, 0
    %p74 = por %p72, %p73
    %p75 = scmp.ne.s32.totalorder %s61, %s62
    %p76 = scmp.eq.s32.totalorder %s14, 1
    %p77 = por %p75, %p76
    %p79 = scmp.ne.s32.totalorder %s62, %s78
    %p80 = scmp.eq.s32.totalorder %s14, 0
    %p81 = por %p79, %p80
    %s82 = ssub.s32 %s15, %s27
    %s83 = ssub.s32 %s16, %s23
    %s84 = sor.u32 %s82, %s83
    %p85 = scmp.eq.s32.totalorder %s84, 0
    %s87 = sadd.s32 %s86, 1
    %s88 = scalar_select %p85, %s86, %s87
    %p91 = pneg %p85
    %p92 = scmp.eq.s32.totalorder %s8, 1
    %p93 = por %p91, %p92
    %p94 = scmp.ne.s32.totalorder %s86, %s89
    %p95 = scmp.eq.s32.totalorder %s8, 0
    %p96 = por %p94, %p95
    %p97 = scmp.ne.s32.totalorder %s86, %s89
    %p98 = scmp.eq.s32.totalorder %s13, 1
    %p99 = por %p97, %p98
    %p100 = scmp.ne.s32.totalorder %s89, %s90
    %p101 = scmp.eq.s32.totalorder %s13, 0
    %p102 = por %p100, %p101
    %p103 = scmp.ne.s32.totalorder %s89, %s90
    %p104 = scmp.eq.s32.totalorder %s14, 1
    %p105 = por %p103, %p104
    %p107 = scmp.ne.s32.totalorder %s90, %s106
    %p108 = scmp.eq.s32.totalorder %s14, 0
    %p109 = por %p107, %p108
    %p110 = scmp.le.s32.totalorder 1, %s8
    %p111 = scmp.lt.s32.totalorder %s8, 3
    %p112 = pnand %p110, %p111
    %p113 = pneg %p112
    // Predicated region
    $region9: #{ucoea_forward.3} parent=5 // pred_check
      _
    $region10: #{ucoea_forward.3} parent=5 // pred_check_branch
      %115 = sbr.rel (%p112) target = $region12
    $region11: #{ucoea_forward.3} parent=5 // pred_region
      %s116 = ssub.s32 %s8, 1
      // Predicated region
      $region13: #{ucoea_forward.3} parent=11 // pred_check
        %p117 = pneg %p74
      $region14: #{ucoea_forward.3} parent=11 // pred_check_branch
        %119 = sbr.rel (%p117) target = $region16
      $region15: #{ucoea_forward.3} parent=11 // pred_region
        %s120 = smul.u32 4, %s18
        %p121 = scmp.lt.s32.totalorder %s120, 3
        %s122 = scalar_select %p121, %s120, 3
        %s123 = scalar_lea.vmem %s1, %s122
        %s124 = smul.u32 4, %s18
      $region16: #{ucoea_forward.3} parent=11 // pred_fallthru
        _
    $region12: #{ucoea_forward.3} parent=5 // pred_fallthru
      _
    %p125 = scmp.lt.s32.totalorder %s8, 2
    // Predicated region
    $region17: #{ucoea_forward.3} parent=5 // pred_check
      %p126 = pneg %p125
    $region18: #{ucoea_forward.3} parent=5 // pred_check_branch
      %128 = sbr.rel (%p126) target = $region20
    $region19: #{ucoea_forward.3} parent=5 // pred_region
      // Predicated region
      $region21: #{ucoea_forward.3} parent=19 // pred_check
        %p129 = pneg %p42
      $region22: #{ucoea_forward.3} parent=19 // pred_check_branch
        %131 = sbr.rel (%p129) target = $region24
      $region23: #{ucoea_forward.3} parent=19 // pred_region
        %s132 = smul.u32 4, %s16
        %p133 = scmp.lt.s32.totalorder %s15, 1
        %s134 = scalar_select %p133, %s15, 1
        %p135 = scmp.lt.s32.totalorder %s132, 3
        %s136 = scalar_select %p135, %s132, 3
        %s137 = smul.addr %s134, 32
        %s138 = sadd.s32 %s136, %s137
        %s139 = smul.addr %s138, 8
        %s140 = scalar_lea.vmem %s0, %s139
        %s141 = smul.u32 4, %s16
      $region24: #{ucoea_forward.3} parent=19 // pred_fallthru
        _
    $region20: #{ucoea_forward.3} parent=5 // pred_fallthru
      _
    %p142 = scmp.le.s32.totalorder 1, %s8
    %p143 = scmp.lt.s32.totalorder %s8, 3
    %p144 = pnand %p142, %p143
    %p145 = pneg %p144
    // Predicated region
    $region25: #{ucoea_forward.3} parent=5 // pred_check
      _
    $region26: #{ucoea_forward.3} parent=5 // pred_check_branch
      %147 = sbr.rel (%p144) target = $region28
    $region27: #{ucoea_forward.3} parent=5 // pred_region
      %s148 = ssub.s32 %s8, 1
      %s149 = smul.u32 4, %s18
      %p150 = scmp.lt.s32.totalorder %s17, 1
      %s151 = scalar_select %p150, %s17, 1
      %p152 = scmp.lt.s32.totalorder %s149, 3
      %s153 = scalar_select %p152, %s149, 3
      %s154 = smul.addr %s151, 32
      %s155 = sadd.s32 %s153, %s154
      %s156 = smul.addr %s155, 8
      %s157 = scalar_lea.vmem %s0, %s156
      %p158 = pneg %p48
      %p159 = pneg %p45
      %s160 = smul.u32 4, %s18
      %p161 = scmp.lt.s32.totalorder %s160, 3
      %s162 = scalar_select %p161, %s160, 3
      %s163 = scalar_lea.vmem %s1, %s162
      %p164 = pneg %p74
      %p165 = pneg %p71
      %p166 = pneg %p102
      %p167 = pneg %p99
      %s168 = smul.u32 4, %s18
      %p169 = scmp.lt.s32.totalorder %s17, 1
      %s170 = scalar_select %p169, %s17, 1
      %p171 = scmp.lt.s32.totalorder %s168, 3
      %s172 = scalar_select %p171, %s168, 3
      %s173 = smul.addr %s170, 4
      %s174 = sadd.s32 %s172, %s173
      %s175 = smul.addr %s174, 8
      %s176 = scalar_lea.vmem %s2, %s175
      %s177 = smul.u32 4, %s18
      %p178 = scmp.lt.s32.totalorder %s17, 1
      %s179 = scalar_select %p178, %s17, 1
      %p180 = scmp.lt.s32.totalorder %s177, 3
      %s181 = scalar_select %p180, %s177, 3
      %s182 = smul.addr %s179, 32
      %s183 = sadd.s32 %s181, %s182
      %s184 = smul.addr %s183, 8
      %s185 = scalar_lea.vmem %s0, %s184
      %s186 = smul.u32 4, %s18
      %s187 = smul.u32 4, %s18
      %p188 = scmp.lt.s32.totalorder %s187, 3
      %s189 = scalar_select %p188, %s187, 3
      %s190 = scalar_lea.vmem %s1, %s189
      %s191 = smul.u32 4, %s18
      %s192 = smul.u32 4, %s18
      %p193 = scmp.lt.s32.totalorder %s17, 1
      %s194 = scalar_select %p193, %s17, 1
      %p195 = scmp.lt.s32.totalorder %s192, 3
      %s196 = scalar_select %p195, %s192, 3
      %s197 = smul.addr %s194, 4
      %s198 = sadd.s32 %s196, %s197
      %s199 = smul.addr %s198, 8
      %s200 = scalar_lea.vmem %s2, %s199
      %s201 = smul.u32 4, %s18
      %v202 = vld [vmem:[%s190] sm:$0x1]
      %v203 = vld [vmem:[%s190 + $0x1] sm:$0x1]
      %v204 = vld [vmem:[%s190 + $0x2] sm:$0x1]
      %v205 = vld [vmem:[%s190 + $0x3] sm:$0x1]
      %v206 = vld [vmem:[%s190 + $0x4] sm:$0x1]
      %v207 = vld [vmem:[%s190 + $0x5] sm:$0x1]
      %v208 = vld [vmem:[%s190 + $0x6] sm:$0x1]
      %v209 = vld [vmem:[%s190 + $0x7] sm:$0x1]
      %v210 = vld [vmem:[%s190 + $0x8] sm:$0x1]
      %v211 = vld [vmem:[%s190 + $0x9] sm:$0x1]
      %v212 = vld [vmem:[%s190 + $0xa] sm:$0x1]
      %v213 = vld [vmem:[%s190 + $0xb] sm:$0x1]
      %v214 = vld [vmem:[%s190 + $0xc] sm:$0x1]
      %v215 = vld [vmem:[%s190 + $0xd] sm:$0x1]
      %v216 = vld [vmem:[%s190 + $0xe] sm:$0x1]
      %v217 = vld [vmem:[%s190 + $0xf] sm:$0x1]
      %v218 = vld [vmem:[%s190 + $0x10] sm:$0x1]
      %v219 = vld [vmem:[%s190 + $0x11] sm:$0x1]
      %v220 = vld [vmem:[%s190 + $0x12] sm:$0x1]
      %v221 = vld [vmem:[%s190 + $0x13] sm:$0x1]
      %v222 = vld [vmem:[%s190 + $0x14] sm:$0x1]
      %v223 = vld [vmem:[%s190 + $0x15] sm:$0x1]
      %v224 = vld [vmem:[%s190 + $0x16] sm:$0x1]
      %v225 = vld [vmem:[%s190 + $0x17] sm:$0x1]
      %v226 = vld [vmem:[%s190 + $0x18] sm:$0x1]
      %v227 = vld [vmem:[%s190 + $0x19] sm:$0x1]
      %v228 = vld [vmem:[%s190 + $0x1a] sm:$0x1]
      %v229 = vld [vmem:[%s190 + $0x1b] sm:$0x1]
      %v230 = vld [vmem:[%s190 + $0x1c] sm:$0x1]
      %v231 = vld [vmem:[%s190 + $0x1d] sm:$0x1]
      %v232 = vld [vmem:[%s190 + $0x1e] sm:$0x1]
      %v233 = vld [vmem:[%s190 + $0x1f] sm:$0x1]
      %v234 = vld [vmem:[%s190 + $0x20] sm:$0x1]
      %v235 = vld [vmem:[%s190 + $0x21] sm:$0x1]
      %v236 = vld [vmem:[%s190 + $0x22] sm:$0x1]
      %v237 = vld [vmem:[%s190 + $0x23] sm:$0x1]
      %v238 = vld [vmem:[%s190 + $0x24] sm:$0x1]
      %v239 = vld [vmem:[%s190 + $0x25] sm:$0x1]
      %v240 = vld [vmem:[%s190 + $0x26] sm:$0x1]
      %v241 = vld [vmem:[%s190 + $0x27] sm:$0x1]
      %v242 = vld [vmem:[%s190 + $0x28] sm:$0x1]
      %v243 = vld [vmem:[%s190 + $0x29] sm:$0x1]
      %v244 = vld [vmem:[%s190 + $0x2a] sm:$0x1]
      %v245 = vld [vmem:[%s190 + $0x2b] sm:$0x1]
      %v246 = vld [vmem:[%s190 + $0x2c] sm:$0x1]
      %v247 = vld [vmem:[%s190 + $0x2d] sm:$0x1]
      %v248 = vld [vmem:[%s190 + $0x2e] sm:$0x1]
      %v249 = vld [vmem:[%s190 + $0x2f] sm:$0x1]
      %v250 = vld [vmem:[%s190 + $0x30] sm:$0x1]
      %v251 = vld [vmem:[%s190 + $0x31] sm:$0x1]
      %v252 = vld [vmem:[%s190 + $0x32] sm:$0x1]
      %v253 = vld [vmem:[%s190 + $0x33] sm:$0x1]
      %v254 = vld [vmem:[%s190 + $0x34] sm:$0x1]
      %v255 = vld [vmem:[%s190 + $0x35] sm:$0x1]
      %v256 = vld [vmem:[%s190 + $0x36] sm:$0x1]
      %v257 = vld [vmem:[%s190 + $0x37] sm:$0x1]
      %v258 = vld [vmem:[%s190 + $0x38] sm:$0x1]
      %v259 = vld [vmem:[%s190 + $0x39] sm:$0x1]
      %v260 = vld [vmem:[%s190 + $0x3a] sm:$0x1]
      %v261 = vld [vmem:[%s190 + $0x3b] sm:$0x1]
      %v262 = vld [vmem:[%s190 + $0x3c] sm:$0x1]
      %v263 = vld [vmem:[%s190 + $0x3d] sm:$0x1]
      %v264 = vld [vmem:[%s190 + $0x3e] sm:$0x1]
      %v265 = vld [vmem:[%s190 + $0x3f] sm:$0x1]
      %v266 = vld [vmem:[%s190 + $0x40] sm:$0x1]
      %v267 = vld [vmem:[%s190 + $0x41] sm:$0x1]
      %v268 = vld [vmem:[%s190 + $0x42] sm:$0x1]
      %v269 = vld [vmem:[%s190 + $0x43] sm:$0x1]
      %v270 = vld [vmem:[%s190 + $0x44] sm:$0x1]
      %v271 = vld [vmem:[%s190 + $0x45] sm:$0x1]
      %v272 = vld [vmem:[%s190 + $0x46] sm:$0x1]
      %v273 = vld [vmem:[%s190 + $0x47] sm:$0x1]
      %v274 = vld [vmem:[%s185] sm:$0xff]
      %v275 = vld [vmem:[%s185 + $0x8] sm:$0xff]
      %v276 = vld [vmem:[%s185 + $0x10] sm:$0xff]
      %v277 = vld [vmem:[%s185 + $0x18] sm:$0xff]
      %s278 = scalar_lea.vmem %s185, 32
      %v279 = vld [vmem:[%s278] sm:$0xff]
      %v280 = vld [vmem:[%s278 + $0x8] sm:$0xff]
      %v281 = vld [vmem:[%s278 + $0x10] sm:$0xff]
      %v282 = vld [vmem:[%s278 + $0x18] sm:$0xff]
      %s283 = scalar_lea.vmem %s185, 64
      %v284 = vld [vmem:[%s283] sm:$0xff]
      %v285 = vld [vmem:[%s283 + $0x8] sm:$0xff]
      %v286 = vld [vmem:[%s283 + $0x10] sm:$0xff]
      %v287 = vld [vmem:[%s283 + $0x18] sm:$0xff]
      %s288 = scalar_lea.vmem %s185, 96
      %v289 = vld [vmem:[%s288] sm:$0xff]
      %v290 = vld [vmem:[%s288 + $0x8] sm:$0xff]
      %v291 = vld [vmem:[%s288 + $0x10] sm:$0xff]
      %v292 = vld [vmem:[%s288 + $0x18] sm:$0xff]
      %v297 = vperm.slane %v218, 0
      %v298 = vperm.slane %v219, 0
      %v299 = vperm.slane %v220, 0
      %v300 = vperm.slane %v221, 0
      %301 = vset.pattern.permute.xlu0 0
      %302 = vperm.xlu0 %301, %v297
      %v303 = vpop.permute.xlu0 %302
      %305 = vset.pattern.permute.xlu0 0
      %306 = vperm.xlu0 %305, %v298
      %v307 = vpop.permute.xlu0 %306
      %309 = vset.pattern.permute.xlu0 0
      %310 = vperm.xlu0 %309, %v299
      %v311 = vpop.permute.xlu0 %310
      %313 = vset.pattern.permute.xlu0 0
      %314 = vperm.xlu0 %313, %v300
      %v315 = vpop.permute.xlu0 %314
      %v317 = vmul.f32 %v303, %v274
      %v318 = vmul.f32 %v307, %v275
      %v319 = vmul.f32 %v311, %v276
      %v320 = vmul.f32 %v315, %v277
      %v325 = vperm.slane %v222, 0
      %v326 = vperm.slane %v223, 0
      %v327 = vperm.slane %v224, 0
      %v328 = vperm.slane %v225, 0
      %329 = vset.pattern.permute.xlu0 0
      %330 = vperm.xlu0 %329, %v325
      %v331 = vpop.permute.xlu0 %330
      %333 = vset.pattern.permute.xlu0 0
      %334 = vperm.xlu0 %333, %v326
      %v335 = vpop.permute.xlu0 %334
      %337 = vset.pattern.permute.xlu0 0
      %338 = vperm.xlu0 %337, %v327
      %v339 = vpop.permute.xlu0 %338
      %341 = vset.pattern.permute.xlu0 0
      %342 = vperm.xlu0 %341, %v328
      %v343 = vpop.permute.xlu0 %342
      %v345 = vmul.f32 %v331, %v279
      %v346 = vmul.f32 %v335, %v280
      %v347 = vmul.f32 %v339, %v281
      %v348 = vmul.f32 %v343, %v282
      %v349 = vadd.f32 %v317, %v345
      %v350 = vadd.f32 %v318, %v346
      %v351 = vadd.f32 %v319, %v347
      %v352 = vadd.f32 %v320, %v348
      %v357 = vperm.slane %v230, 0
      %v358 = vperm.slane %v231, 0
      %v359 = vperm.slane %v232, 0
      %v360 = vperm.slane %v233, 0
      %361 = vset.pattern.permute.xlu0 0
      %362 = vperm.xlu0 %361, %v357
      %v363 = vpop.permute.xlu0 %362
      %365 = vset.pattern.permute.xlu0 0
      %366 = vperm.xlu0 %365, %v358
      %v367 = vpop.permute.xlu0 %366
      %369 = vset.pattern.permute.xlu0 0
      %370 = vperm.xlu0 %369, %v359
      %v371 = vpop.permute.xlu0 %370
      %373 = vset.pattern.permute.xlu0 0
      %374 = vperm.xlu0 %373, %v360
      %v375 = vpop.permute.xlu0 %374
      %v377 = vmul.f32 %v363, %v284
      %v378 = vmul.f32 %v367, %v285
      %v379 = vmul.f32 %v371, %v286
      %v380 = vmul.f32 %v375, %v287
      %v381 = vadd.f32 %v349, %v377
      %v382 = vadd.f32 %v350, %v378
      %v383 = vadd.f32 %v351, %v379
      %v384 = vadd.f32 %v352, %v380
      %v389 = vperm.slane %v234, 0
      %v390 = vperm.slane %v235, 0
      %v391 = vperm.slane %v236, 0
      %v392 = vperm.slane %v237, 0
      %393 = vset.pattern.permute.xlu0 0
      %394 = vperm.xlu0 %393, %v389
      %v395 = vpop.permute.xlu0 %394
      %397 = vset.pattern.permute.xlu0 0
      %398 = vperm.xlu0 %397, %v390
      %v399 = vpop.permute.xlu0 %398
      %401 = vset.pattern.permute.xlu0 0
      %402 = vperm.xlu0 %401, %v391
      %v403 = vpop.permute.xlu0 %402
      %405 = vset.pattern.permute.xlu0 0
      %406 = vperm.xlu0 %405, %v392
      %v407 = vpop.permute.xlu0 %406
      %v409 = vmul.f32 %v395, %v289
      %v410 = vmul.f32 %v399, %v290
      %v411 = vmul.f32 %v403, %v291
      %v412 = vmul.f32 %v407, %v292
      %v413 = vadd.f32 %v381, %v409
      %v414 = vadd.f32 %v382, %v410
      %v415 = vadd.f32 %v383, %v411
      %v416 = vadd.f32 %v384, %v412
      %v417 = vadd.f32 %v413, 0.0
      %v418 = vadd.f32 %v414, 0.0
      %v419 = vadd.f32 %v415, 0.0
      %v420 = vadd.f32 %v416, 0.0
      %v425 = vperm.slane %v214, 0
      %v426 = vperm.slane %v215, 0
      %v427 = vperm.slane %v216, 0
      %v428 = vperm.slane %v217, 0
      %429 = vset.pattern.permute.xlu0 0
      %430 = vperm.xlu0 %429, %v425
      %v431 = vpop.permute.xlu0 %430
      %433 = vset.pattern.permute.xlu0 0
      %434 = vperm.xlu0 %433, %v426
      %v435 = vpop.permute.xlu0 %434
      %437 = vset.pattern.permute.xlu0 0
      %438 = vperm.xlu0 %437, %v427
      %v439 = vpop.permute.xlu0 %438
      %441 = vset.pattern.permute.xlu0 0
      %442 = vperm.xlu0 %441, %v428
      %v443 = vpop.permute.xlu0 %442
      %v445 = vmul.f32 %v431, %v279
      %v446 = vmul.f32 %v435, %v280
      %v447 = vmul.f32 %v439, %v281
      %v448 = vmul.f32 %v443, %v282
      %v453 = vperm.slane %v226, 0
      %v454 = vperm.slane %v227, 0
      %v455 = vperm.slane %v228, 0
      %v456 = vperm.slane %v229, 0
      %457 = vset.pattern.permute.xlu0 0
      %458 = vperm.xlu0 %457, %v453
      %v459 = vpop.permute.xlu0 %458
      %461 = vset.pattern.permute.xlu0 0
      %462 = vperm.xlu0 %461, %v454
      %v463 = vpop.permute.xlu0 %462
      %465 = vset.pattern.permute.xlu0 0
      %466 = vperm.xlu0 %465, %v455
      %v467 = vpop.permute.xlu0 %466
      %469 = vset.pattern.permute.xlu0 0
      %470 = vperm.xlu0 %469, %v456
      %v471 = vpop.permute.xlu0 %470
      %v473 = vmul.f32 %v459, %v289
      %v474 = vmul.f32 %v463, %v290
      %v475 = vmul.f32 %v467, %v291
      %v476 = vmul.f32 %v471, %v292
      %v477 = vadd.f32 %v445, %v473
      %v478 = vadd.f32 %v446, %v474
      %v479 = vadd.f32 %v447, %v475
      %v480 = vadd.f32 %v448, %v476
      %485 = vrot.lane.b32.xlu0 %v477, 1
      %v486 = vpop.permute.xlu0 %485
      %487 = vrot.lane.b32.xlu0 %v478, 1
      %v488 = vpop.permute.xlu0 %487
      %489 = vrot.lane.b32.xlu0 %v479, 1
      %v490 = vpop.permute.xlu0 %489
      %491 = vrot.lane.b32.xlu0 %v480, 1
      %v492 = vpop.permute.xlu0 %491
      %vm497 = vcmask 7168
      %v498 = vsel %vm497, 0.0, %v486
      %v499 = vsel %vm497, 0.0, %v488
      %v500 = vsel %vm497, 0.0, %v490
      %v501 = vsel %vm497, 0.0, %v492
      %v502 = vadd.f32 %v417, %v498
      %v503 = vadd.f32 %v418, %v499
      %v504 = vadd.f32 %v419, %v500
      %v505 = vadd.f32 %v420, %v501
      %v510 = vperm.slane %v206, 0
      %v511 = vperm.slane %v207, 0
      %v512 = vperm.slane %v208, 0
      %v513 = vperm.slane %v209, 0
      %514 = vset.pattern.permute.xlu0 0
      %515 = vperm.xlu0 %514, %v510
      %v516 = vpop.permute.xlu0 %515
      %518 = vset.pattern.permute.xlu0 0
      %519 = vperm.xlu0 %518, %v511
      %v520 = vpop.permute.xlu0 %519
      %522 = vset.pattern.permute.xlu0 0
      %523 = vperm.xlu0 %522, %v512
      %v524 = vpop.permute.xlu0 %523
      %526 = vset.pattern.permute.xlu0 0
      %527 = vperm.xlu0 %526, %v513
      %v528 = vpop.permute.xlu0 %527
      %v530 = vmul.f32 %v516, %v284
      %v531 = vmul.f32 %v520, %v285
      %v532 = vmul.f32 %v524, %v286
      %v533 = vmul.f32 %v528, %v287
      %v538 = vperm.slane %v210, 0
      %v539 = vperm.slane %v211, 0
      %v540 = vperm.slane %v212, 0
      %v541 = vperm.slane %v213, 0
      %542 = vset.pattern.permute.xlu0 0
      %543 = vperm.xlu0 %542, %v538
      %v544 = vpop.permute.xlu0 %543
      %546 = vset.pattern.permute.xlu0 0
      %547 = vperm.xlu0 %546, %v539
      %v548 = vpop.permute.xlu0 %547
      %550 = vset.pattern.permute.xlu0 0
      %551 = vperm.xlu0 %550, %v540
      %v552 = vpop.permute.xlu0 %551
      %554 = vset.pattern.permute.xlu0 0
      %555 = vperm.xlu0 %554, %v541
      %v556 = vpop.permute.xlu0 %555
      %v558 = vmul.f32 %v544, %v289
      %v559 = vmul.f32 %v548, %v290
      %v560 = vmul.f32 %v552, %v291
      %v561 = vmul.f32 %v556, %v292
      %v562 = vadd.f32 %v530, %v558
      %v563 = vadd.f32 %v531, %v559
      %v564 = vadd.f32 %v532, %v560
      %v565 = vadd.f32 %v533, %v561
      %v570 = vperm.slane %v202, 0
      %v571 = vperm.slane %v203, 0
      %v572 = vperm.slane %v204, 0
      %v573 = vperm.slane %v205, 0
      %574 = vset.pattern.permute.xlu0 0
      %575 = vperm.xlu0 %574, %v570
      %v576 = vpop.permute.xlu0 %575
      %578 = vset.pattern.permute.xlu0 0
      %579 = vperm.xlu0 %578, %v571
      %v580 = vpop.permute.xlu0 %579
      %582 = vset.pattern.permute.xlu0 0
      %583 = vperm.xlu0 %582, %v572
      %v584 = vpop.permute.xlu0 %583
      %586 = vset.pattern.permute.xlu0 0
      %587 = vperm.xlu0 %586, %v573
      %v588 = vpop.permute.xlu0 %587
      %v590 = vmul.f32 %v576, %v289
      %v591 = vmul.f32 %v580, %v290
      %v592 = vmul.f32 %v584, %v291
      %v593 = vmul.f32 %v588, %v292
      %598 = vrot.lane.b32.xlu0 %v590, 1
      %v599 = vpop.permute.xlu0 %598
      %600 = vrot.lane.b32.xlu0 %v591, 1
      %v601 = vpop.permute.xlu0 %600
      %602 = vrot.lane.b32.xlu0 %v592, 1
      %v603 = vpop.permute.xlu0 %602
      %604 = vrot.lane.b32.xlu0 %v593, 1
      %v605 = vpop.permute.xlu0 %604
      %v610 = vsel %vm497, 0.0, %v599
      %v611 = vsel %vm497, 0.0, %v601
      %v612 = vsel %vm497, 0.0, %v603
      %v613 = vsel %vm497, 0.0, %v605
      %v614 = vadd.f32 %v562, %v610
      %v615 = vadd.f32 %v563, %v611
      %v616 = vadd.f32 %v564, %v612
      %v617 = vadd.f32 %v565, %v613
      %v622 = vrot.slane %v614, 7
      %v623 = vrot.slane %v615, 7
      %v624 = vrot.slane %v616, 7
      %v625 = vrot.slane %v617, 7
      %vm630 = vcmask 1040384
      %v631 = vsel %vm630, 0.0, %v622
      %v632 = vsel %vm630, 0.0, %v623
      %v633 = vsel %vm630, 0.0, %v624
      %v634 = vsel %vm630, 0.0, %v625
      %v635 = vadd.f32 %v502, %v631
      %v636 = vadd.f32 %v503, %v632
      %v637 = vadd.f32 %v504, %v633
      %v638 = vadd.f32 %v505, %v634
      %s639 = scalar_lea.vmem %s185, 128
      %v640 = vld [vmem:[%s639] sm:$0xff]
      %v641 = vld [vmem:[%s639 + $0x8] sm:$0xff]
      %v642 = vld [vmem:[%s639 + $0x10] sm:$0xff]
      %v643 = vld [vmem:[%s639 + $0x18] sm:$0xff]
      %s644 = scalar_lea.vmem %s185, 160
      %v645 = vld [vmem:[%s644] sm:$0xff]
      %v646 = vld [vmem:[%s644 + $0x8] sm:$0xff]
      %v647 = vld [vmem:[%s644 + $0x10] sm:$0xff]
      %v648 = vld [vmem:[%s644 + $0x18] sm:$0xff]
      %s649 = scalar_lea.vmem %s185, 192
      %v650 = vld [vmem:[%s649] sm:$0xff]
      %v651 = vld [vmem:[%s649 + $0x8] sm:$0xff]
      %v652 = vld [vmem:[%s649 + $0x10] sm:$0xff]
      %v653 = vld [vmem:[%s649 + $0x18] sm:$0xff]
      %s654 = scalar_lea.vmem %s185, 224
      %v655 = vld [vmem:[%s654] sm:$0xff]
      %v656 = vld [vmem:[%s654 + $0x8] sm:$0xff]
      %v657 = vld [vmem:[%s654 + $0x10] sm:$0xff]
      %v658 = vld [vmem:[%s654 + $0x18] sm:$0xff]
      %v663 = vperm.slane %v254, 0
      %v664 = vperm.slane %v255, 0
      %v665 = vperm.slane %v256, 0
      %v666 = vperm.slane %v257, 0
      %667 = vset.pattern.permute.xlu0 0
      %668 = vperm.xlu0 %667, %v663
      %v669 = vpop.permute.xlu0 %668
      %671 = vset.pattern.permute.xlu0 0
      %672 = vperm.xlu0 %671, %v664
      %v673 = vpop.permute.xlu0 %672
      %675 = vset.pattern.permute.xlu0 0
      %676 = vperm.xlu0 %675, %v665
      %v677 = vpop.permute.xlu0 %676
      %679 = vset.pattern.permute.xlu0 0
      %680 = vperm.xlu0 %679, %v666
      %v681 = vpop.permute.xlu0 %680
      %v683 = vmul.f32 %v669, %v640
      %v684 = vmul.f32 %v673, %v641
      %v685 = vmul.f32 %v677, %v642
      %v686 = vmul.f32 %v681, %v643
      %v691 = vperm.slane %v258, 0
      %v692 = vperm.slane %v259, 0
      %v693 = vperm.slane %v260, 0
      %v694 = vperm.slane %v261, 0
      %695 = vset.pattern.permute.xlu0 0
      %696 = vperm.xlu0 %695, %v691
      %v697 = vpop.permute.xlu0 %696
      %699 = vset.pattern.permute.xlu0 0
      %700 = vperm.xlu0 %699, %v692
      %v701 = vpop.permute.xlu0 %700
      %703 = vset.pattern.permute.xlu0 0
      %704 = vperm.xlu0 %703, %v693
      %v705 = vpop.permute.xlu0 %704
      %707 = vset.pattern.permute.xlu0 0
      %708 = vperm.xlu0 %707, %v694
      %v709 = vpop.permute.xlu0 %708
      %v711 = vmul.f32 %v697, %v645
      %v712 = vmul.f32 %v701, %v646
      %v713 = vmul.f32 %v705, %v647
      %v714 = vmul.f32 %v709, %v648
      %v715 = vadd.f32 %v683, %v711
      %v716 = vadd.f32 %v684, %v712
      %v717 = vadd.f32 %v685, %v713
      %v718 = vadd.f32 %v686, %v714
      %v723 = vperm.slane %v266, 0
      %v724 = vperm.slane %v267, 0
      %v725 = vperm.slane %v268, 0
      %v726 = vperm.slane %v269, 0
      %727 = vset.pattern.permute.xlu0 0
      %728 = vperm.xlu0 %727, %v723
      %v729 = vpop.permute.xlu0 %728
      %731 = vset.pattern.permute.xlu0 0
      %732 = vperm.xlu0 %731, %v724
      %v733 = vpop.permute.xlu0 %732
      %735 = vset.pattern.permute.xlu0 0
      %736 = vperm.xlu0 %735, %v725
      %v737 = vpop.permute.xlu0 %736
      %739 = vset.pattern.permute.xlu0 0
      %740 = vperm.xlu0 %739, %v726
      %v741 = vpop.permute.xlu0 %740
      %v743 = vmul.f32 %v729, %v650
      %v744 = vmul.f32 %v733, %v651
      %v745 = vmul.f32 %v737, %v652
      %v746 = vmul.f32 %v741, %v653
      %v747 = vadd.f32 %v715, %v743
      %v748 = vadd.f32 %v716, %v744
      %v749 = vadd.f32 %v717, %v745
      %v750 = vadd.f32 %v718, %v746
      %v755 = vperm.slane %v270, 0
      %v756 = vperm.slane %v271, 0
      %v757 = vperm.slane %v272, 0
      %v758 = vperm.slane %v273, 0
      %759 = vset.pattern.permute.xlu0 0
      %760 = vperm.xlu0 %759, %v755
      %v761 = vpop.permute.xlu0 %760
      %763 = vset.pattern.permute.xlu0 0
      %764 = vperm.xlu0 %763, %v756
      %v765 = vpop.permute.xlu0 %764
      %767 = vset.pattern.permute.xlu0 0
      %768 = vperm.xlu0 %767, %v757
      %v769 = vpop.permute.xlu0 %768
      %771 = vset.pattern.permute.xlu0 0
      %772 = vperm.xlu0 %771, %v758
      %v773 = vpop.permute.xlu0 %772
      %v775 = vmul.f32 %v761, %v655
      %v776 = vmul.f32 %v765, %v656
      %v777 = vmul.f32 %v769, %v657
      %v778 = vmul.f32 %v773, %v658
      %v779 = vadd.f32 %v747, %v775
      %v780 = vadd.f32 %v748, %v776
      %v781 = vadd.f32 %v749, %v777
      %v782 = vadd.f32 %v750, %v778
      %v783 = vadd.f32 %v635, %v779
      %v784 = vadd.f32 %v636, %v780
      %v785 = vadd.f32 %v637, %v781
      %v786 = vadd.f32 %v638, %v782
      %v791 = vperm.slane %v250, 0
      %v792 = vperm.slane %v251, 0
      %v793 = vperm.slane %v252, 0
      %v794 = vperm.slane %v253, 0
      %795 = vset.pattern.permute.xlu0 0
      %796 = vperm.xlu0 %795, %v791
      %v797 = vpop.permute.xlu0 %796
      %799 = vset.pattern.permute.xlu0 0
      %800 = vperm.xlu0 %799, %v792
      %v801 = vpop.permute.xlu0 %800
      %803 = vset.pattern.permute.xlu0 0
      %804 = vperm.xlu0 %803, %v793
      %v805 = vpop.permute.xlu0 %804
      %807 = vset.pattern.permute.xlu0 0
      %808 = vperm.xlu0 %807, %v794
      %v809 = vpop.permute.xlu0 %808
      %v811 = vmul.f32 %v797, %v645
      %v812 = vmul.f32 %v801, %v646
      %v813 = vmul.f32 %v805, %v647
      %v814 = vmul.f32 %v809, %v648
      %v819 = vperm.slane %v262, 0
      %v820 = vperm.slane %v263, 0
      %v821 = vperm.slane %v264, 0
      %v822 = vperm.slane %v265, 0
      %823 = vset.pattern.permute.xlu0 0
      %824 = vperm.xlu0 %823, %v819
      %v825 = vpop.permute.xlu0 %824
      %827 = vset.pattern.permute.xlu0 0
      %828 = vperm.xlu0 %827, %v820
      %v829 = vpop.permute.xlu0 %828
      %831 = vset.pattern.permute.xlu0 0
      %832 = vperm.xlu0 %831, %v821
      %v833 = vpop.permute.xlu0 %832
      %835 = vset.pattern.permute.xlu0 0
      %836 = vperm.xlu0 %835, %v822
      %v837 = vpop.permute.xlu0 %836
      %v839 = vmul.f32 %v825, %v655
      %v840 = vmul.f32 %v829, %v656
      %v841 = vmul.f32 %v833, %v657
      %v842 = vmul.f32 %v837, %v658
      %v843 = vadd.f32 %v811, %v839
      %v844 = vadd.f32 %v812, %v840
      %v845 = vadd.f32 %v813, %v841
      %v846 = vadd.f32 %v814, %v842
      %851 = vrot.lane.b32.xlu0 %v843, 1
      %v852 = vpop.permute.xlu0 %851
      %853 = vrot.lane.b32.xlu0 %v844, 1
      %v854 = vpop.permute.xlu0 %853
      %855 = vrot.lane.b32.xlu0 %v845, 1
      %v856 = vpop.permute.xlu0 %855
      %857 = vrot.lane.b32.xlu0 %v846, 1
      %v858 = vpop.permute.xlu0 %857
      %v863 = vsel %vm497, 0.0, %v852
      %v864 = vsel %vm497, 0.0, %v854
      %v865 = vsel %vm497, 0.0, %v856
      %v866 = vsel %vm497, 0.0, %v858
      %v867 = vadd.f32 %v783, %v863
      %v868 = vadd.f32 %v784, %v864
      %v869 = vadd.f32 %v785, %v865
      %v870 = vadd.f32 %v786, %v866
      %v875 = vperm.slane %v242, 0
      %v876 = vperm.slane %v243, 0
      %v877 = vperm.slane %v244, 0
      %v878 = vperm.slane %v245, 0
      %879 = vset.pattern.permute.xlu0 0
      %880 = vperm.xlu0 %879, %v875
      %v881 = vpop.permute.xlu0 %880
      %883 = vset.pattern.permute.xlu0 0
      %884 = vperm.xlu0 %883, %v876
      %v885 = vpop.permute.xlu0 %884
      %887 = vset.pattern.permute.xlu0 0
      %888 = vperm.xlu0 %887, %v877
      %v889 = vpop.permute.xlu0 %888
      %891 = vset.pattern.permute.xlu0 0
      %892 = vperm.xlu0 %891, %v878
      %v893 = vpop.permute.xlu0 %892
      %v895 = vmul.f32 %v881, %v650
      %v896 = vmul.f32 %v885, %v651
      %v897 = vmul.f32 %v889, %v652
      %v898 = vmul.f32 %v893, %v653
      %v903 = vperm.slane %v246, 0
      %v904 = vperm.slane %v247, 0
      %v905 = vperm.slane %v248, 0
      %v906 = vperm.slane %v249, 0
      %907 = vset.pattern.permute.xlu0 0
      %908 = vperm.xlu0 %907, %v903
      %v909 = vpop.permute.xlu0 %908
      %911 = vset.pattern.permute.xlu0 0
      %912 = vperm.xlu0 %911, %v904
      %v913 = vpop.permute.xlu0 %912
      %915 = vset.pattern.permute.xlu0 0
      %916 = vperm.xlu0 %915, %v905
      %v917 = vpop.permute.xlu0 %916
      %919 = vset.pattern.permute.xlu0 0
      %920 = vperm.xlu0 %919, %v906
      %v921 = vpop.permute.xlu0 %920
      %v923 = vmul.f32 %v909, %v655
      %v924 = vmul.f32 %v913, %v656
      %v925 = vmul.f32 %v917, %v657
      %v926 = vmul.f32 %v921, %v658
      %v927 = vadd.f32 %v895, %v923
      %v928 = vadd.f32 %v896, %v924
      %v929 = vadd.f32 %v897, %v925
      %v930 = vadd.f32 %v898, %v926
      %v935 = vperm.slane %v238, 0
      %v936 = vperm.slane %v239, 0
      %v937 = vperm.slane %v240, 0
      %v938 = vperm.slane %v241, 0
      %939 = vset.pattern.permute.xlu0 0
      %940 = vperm.xlu0 %939, %v935
      %v941 = vpop.permute.xlu0 %940
      %943 = vset.pattern.permute.xlu0 0
      %944 = vperm.xlu0 %943, %v936
      %v945 = vpop.permute.xlu0 %944
      %947 = vset.pattern.permute.xlu0 0
      %948 = vperm.xlu0 %947, %v937
      %v949 = vpop.permute.xlu0 %948
      %951 = vset.pattern.permute.xlu0 0
      %952 = vperm.xlu0 %951, %v938
      %v953 = vpop.permute.xlu0 %952
      %v955 = vmul.f32 %v941, %v655
      %v956 = vmul.f32 %v945, %v656
      %v957 = vmul.f32 %v949, %v657
      %v958 = vmul.f32 %v953, %v658
      %963 = vrot.lane.b32.xlu0 %v955, 1
      %v964 = vpop.permute.xlu0 %963
      %965 = vrot.lane.b32.xlu0 %v956, 1
      %v966 = vpop.permute.xlu0 %965
      %967 = vrot.lane.b32.xlu0 %v957, 1
      %v968 = vpop.permute.xlu0 %967
      %969 = vrot.lane.b32.xlu0 %v958, 1
      %v970 = vpop.permute.xlu0 %969
      %v975 = vsel %vm497, 0.0, %v964
      %v976 = vsel %vm497, 0.0, %v966
      %v977 = vsel %vm497, 0.0, %v968
      %v978 = vsel %vm497, 0.0, %v970
      %v979 = vadd.f32 %v927, %v975
      %v980 = vadd.f32 %v928, %v976
      %v981 = vadd.f32 %v929, %v977
      %v982 = vadd.f32 %v930, %v978
      %v987 = vrot.slane %v979, 7
      %v988 = vrot.slane %v980, 7
      %v989 = vrot.slane %v981, 7
      %v990 = vrot.slane %v982, 7
      %v995 = vsel %vm630, 0.0, %v987
      %v996 = vsel %vm630, 0.0, %v988
      %v997 = vsel %vm630, 0.0, %v989
      %v998 = vsel %vm630, 0.0, %v990
      %v999 = vadd.f32 %v867, %v995
      %v1000 = vadd.f32 %v868, %v996
      %v1001 = vadd.f32 %v869, %v997
      %v1002 = vadd.f32 %v870, %v998
      %vm1003 = vcmask 64512
      %1004 = vst.msk [vmem:[%s200] sm:$0xff] %vm1003, %v999
      %1005 = vst.msk [vmem:[%s200 + $0x8] sm:$0xff] %vm1003, %v1000
      %1006 = vst.msk [vmem:[%s200 + $0x10] sm:$0xff] %vm1003, %v1001
      %1007 = vst.msk [vmem:[%s200 + $0x18] sm:$0xff] %vm1003, %v1002
      %s1008 = smul.u32 4, %s18
      %p1009 = scmp.lt.s32.totalorder %s17, 1
      %s1010 = scalar_select %p1009, %s17, 1
      %p1011 = scmp.lt.s32.totalorder %s1008, 3
      %s1012 = scalar_select %p1011, %s1008, 3
      %s1013 = smul.addr %s1010, 4
      %s1014 = sadd.s32 %s1012, %s1013
      %s1015 = smul.addr %s1014, 8
      %s1016 = scalar_lea.vmem %s2, %s1015
      // Predicated region
      $region29: #{ucoea_forward.3} parent=27 // pred_check
        %p1017 = pneg %p99
      $region30: #{ucoea_forward.3} parent=27 // pred_check_branch
        %1019 = sbr.rel (%p1017) target = $region32
      $region31: #{ucoea_forward.3} parent=27 // pred_region
        %s1020 = smul.u32 4, %s18
      $region32: #{ucoea_forward.3} parent=27 // pred_fallthru
        _
    $region28: #{ucoea_forward.3} parent=5 // pred_fallthru
      _
    %p1021 = scmp.le.s32.totalorder 2, %s8
    // Predicated region
    $region33: #{ucoea_forward.3} parent=5 // pred_check
      %p1022 = pneg %p1021
    $region34: #{ucoea_forward.3} parent=5 // pred_check_branch
      %1024 = sbr.rel (%p1022) target = $region36
    $region35: #{ucoea_forward.3} parent=5 // pred_region
      %s1025 = ssub.s32 %s8, 2
      // Predicated region
      $region37: #{ucoea_forward.3} parent=35 // pred_check
        %p1026 = pneg %p105
      $region38: #{ucoea_forward.3} parent=35 // pred_check_branch
        %1028 = sbr.rel (%p1026) target = $region40
      $region39: #{ucoea_forward.3} parent=35 // pred_region
        %s1029 = smul.u32 4, %s20
        %p1030 = scmp.lt.s32.totalorder %s19, 1
        %s1031 = scalar_select %p1030, %s19, 1
        %p1032 = scmp.lt.s32.totalorder %s1029, 3
        %s1033 = scalar_select %p1032, %s1029, 3
        %s1034 = smul.addr %s1031, 4
        %s1035 = sadd.s32 %s1033, %s1034
        %s1036 = smul.addr %s1035, 8
        %s1037 = scalar_lea.vmem %s2, %s1036
      $region40: #{ucoea_forward.3} parent=35 // pred_fallthru
        _
    $region36: #{ucoea_forward.3} parent=5 // pred_fallthru
      _
  $region6: #{ucoea_forward.3} parent=0 // loop_footer
    %s12 = sadd.s32 1, %s8
  $region7: #{ucoea_forward.3} parent=0 // loop_footer_branch
    %7 = sbr.rel target = $region3
  $region8: #{ucoea_forward.3} parent=0 // loop_exit
    _

// kernel: ucoea_forward.4
$region0: #{ucoea_forward.4}
  #allocation0 [shape = 'u32[]', space=smem, size = 0x4, offset = 0x4, fixed_abs, tag = 'smem constant byte address 0x4 - core index']
  #allocation1 [shape = 'u32[72,128]{1,0:T(1,128)}', space=vmem, size = 0x9000, scoped, tag = 'internal scratch']
  %s0 = inlined_call_operand.vmem [shape: f32[2,4], index: 0, kind: input, shape index: {}]
  %s1 = inlined_call_operand.vmem [shape: f32[2,4,64], index: 1, kind: input, shape index: {}]
  %s2 = inlined_call_operand.vmem [shape: f32[2,2,64], index: 2, kind: output, shape index: {}]
  %s3 = sld [smem:[#allocation0]]
  $region41: #{ucoea_forward.4} parent=0
    _
  %s5 = ssub.s32 1, %s3
  %s6 = scalar_select 0, %s5, %s3
  loop: start=0, step=1, limit=4
  $region2: #{ucoea_forward.4} parent=0 // loop_pre_header
    _
  $region3: #{ucoea_forward.4} parent=0 // loop_header
    %s8 = sphi 0, %s12
    %p9 = scmp.ge.s32.totalorder %s8, 4
    %s15 = sphi 0, %s27
    %s16 = sphi 0, %s23
    %s17 = sphi 0, %s15
    %s18 = sphi 0, %s16
    %s19 = sphi 0, %s17
    %s20 = sphi 0, %s18
    %s28 = sphi 0, %s28
    %s30 = sphi 0, %s28
    %s31 = sphi 0, %s30
    %s45 = sphi 0, %s31
    %s53 = sphi 0, %s55
    %s56 = sphi 0, %s53
    %s57 = sphi 0, %s56
    %s73 = sphi 0, %s57
    %s81 = sphi 0, %s83
    %s84 = sphi 0, %s81
    %s85 = sphi 0, %s84
    %s101 = sphi 0, %s85
  $region4: #{ucoea_forward.4} parent=0 // loop_header_branch
    %11 = sbr.rel (%p9) target = $region8
  $region5: #{ucoea_forward.4} parent=0 // loop_body
    %s13 = ssub.s32 %s8, 1
    %s14 = ssub.s32 %s8, 2
    %s21 = sadd.s32 1, %s16
    %p22 = scmp.ge.s32.totalorder %s21, 1
    %s23 = scalar_select %p22, 0, %s21
    %s24 = sadd.s32 1, %s15
    %s25 = scalar_select %p22, %s24, %s15
    %p26 = scmp.ge.s32.totalorder %s25, 2
    %s27 = scalar_select %p26, 0, %s25
    %s29 = sadd.s32 %s28, 1
    %p32 = scmp.eq.s32.totalorder %s8, 1
    %p33 = scmp.ne.s32.totalorder %s28, %s30
    %p34 = scmp.eq.s32.totalorder %s8, 0
    %p35 = por %p33, %p34
    %p36 = scmp.ne.s32.totalorder %s28, %s30
    %p37 = scmp.eq.s32.totalorder %s13, 1
    %p38 = por %p36, %p37
    %p39 = scmp.ne.s32.totalorder %s30, %s31
    %p40 = scmp.eq.s32.totalorder %s13, 0
    %p41 = por %p39, %p40
    %p42 = scmp.ne.s32.totalorder %s30, %s31
    %p43 = scmp.eq.s32.totalorder %s14, 1
    %p44 = por %p42, %p43
    %p46 = scmp.ne.s32.totalorder %s31, %s45
    %p47 = scmp.eq.s32.totalorder %s14, 0
    %p48 = por %p46, %p47
    %s49 = ssub.s32 %s15, %s27
    %s50 = ssub.s32 %s16, %s23
    %s51 = sor.u32 %s49, %s50
    %p52 = scmp.eq.s32.totalorder %s51, 0
    %s54 = sadd.s32 %s53, 1
    %s55 = scalar_select %p52, %s53, %s54
    %p58 = pneg %p52
    %p59 = scmp.eq.s32.totalorder %s8, 1
    %p60 = por %p58, %p59
    %p61 = scmp.ne.s32.totalorder %s53, %s56
    %p62 = scmp.eq.s32.totalorder %s8, 0
    %p63 = por %p61, %p62
    %p64 = scmp.ne.s32.totalorder %s53, %s56
    %p65 = scmp.eq.s32.totalorder %s13, 1
    %p66 = por %p64, %p65
    %p67 = scmp.ne.s32.totalorder %s56, %s57
    %p68 = scmp.eq.s32.totalorder %s13, 0
    %p69 = por %p67, %p68
    %p70 = scmp.ne.s32.totalorder %s56, %s57
    %p71 = scmp.eq.s32.totalorder %s14, 1
    %p72 = por %p70, %p71
    %p74 = scmp.ne.s32.totalorder %s57, %s73
    %p75 = scmp.eq.s32.totalorder %s14, 0
    %p76 = por %p74, %p75
    %s77 = ssub.s32 %s15, %s27
    %s78 = ssub.s32 %s16, %s23
    %s79 = sor.u32 %s77, %s78
    %p80 = scmp.eq.s32.totalorder %s79, 0
    %s82 = sadd.s32 %s81, 1
    %s83 = scalar_select %p80, %s81, %s82
    %p86 = pneg %p80
    %p87 = scmp.eq.s32.totalorder %s8, 1
    %p88 = por %p86, %p87
    %p89 = scmp.ne.s32.totalorder %s81, %s84
    %p90 = scmp.eq.s32.totalorder %s8, 0
    %p91 = por %p89, %p90
    %p92 = scmp.ne.s32.totalorder %s81, %s84
    %p93 = scmp.eq.s32.totalorder %s13, 1
    %p94 = por %p92, %p93
    %p95 = scmp.ne.s32.totalorder %s84, %s85
    %p96 = scmp.eq.s32.totalorder %s13, 0
    %p97 = por %p95, %p96
    %p98 = scmp.ne.s32.totalorder %s84, %s85
    %p99 = scmp.eq.s32.totalorder %s14, 1
    %p100 = por %p98, %p99
    %p102 = scmp.ne.s32.totalorder %s85, %s101
    %p103 = scmp.eq.s32.totalorder %s14, 0
    %p104 = por %p102, %p103
    %p105 = scmp.le.s32.totalorder 1, %s8
    %p106 = scmp.lt.s32.totalorder %s8, 3
    %p107 = pnand %p105, %p106
    %p108 = pneg %p107
    // Predicated region
    $region9: #{ucoea_forward.4} parent=5 // pred_check
      _
    $region10: #{ucoea_forward.4} parent=5 // pred_check_branch
      %110 = sbr.rel (%p107) target = $region12
    $region11: #{ucoea_forward.4} parent=5 // pred_region
      %s111 = ssub.s32 %s8, 1
      // Predicated region
      $region13: #{ucoea_forward.4} parent=11 // pred_check
        %p112 = pneg %p41
      $region14: #{ucoea_forward.4} parent=11 // pred_check_branch
        %114 = sbr.rel (%p112) target = $region16
      $region15: #{ucoea_forward.4} parent=11 // pred_region
        _
      $region16: #{ucoea_forward.4} parent=11 // pred_fallthru
        _
    $region12: #{ucoea_forward.4} parent=5 // pred_fallthru
      _
    %p115 = scmp.lt.s32.totalorder %s8, 2
    // Predicated region
    $region17: #{ucoea_forward.4} parent=5 // pred_check
      %p116 = pneg %p115
    $region18: #{ucoea_forward.4} parent=5 // pred_check_branch
      %118 = sbr.rel (%p116) target = $region20
    $region19: #{ucoea_forward.4} parent=5 // pred_region
      // Predicated region
      $region21: #{ucoea_forward.4} parent=19 // pred_check
        %p119 = pneg %p63
      $region22: #{ucoea_forward.4} parent=19 // pred_check_branch
        %121 = sbr.rel (%p119) target = $region24
      $region23: #{ucoea_forward.4} parent=19 // pred_region
        %p122 = scmp.lt.s32.totalorder %s15, 1
        %s123 = scalar_select %p122, %s15, 1
        %p124 = scmp.lt.s32.totalorder %s16, 0
        %s125 = scalar_select %p124, %s16, 0
        %s126 = sadd.s32 %s125, %s123
        %s127 = smul.addr %s126, 4
        %s128 = scalar_lea.vmem %s1, %s127
      $region24: #{ucoea_forward.4} parent=19 // pred_fallthru
        _
    $region20: #{ucoea_forward.4} parent=5 // pred_fallthru
      _
    %p129 = scmp.le.s32.totalorder 1, %s8
    %p130 = scmp.lt.s32.totalorder %s8, 3
    %p131 = pnand %p129, %p130
    %p132 = pneg %p131
    // Predicated region
    $region25: #{ucoea_forward.4} parent=5 // pred_check
      _
    $region26: #{ucoea_forward.4} parent=5 // pred_check_branch
      %134 = sbr.rel (%p131) target = $region28
    $region27: #{ucoea_forward.4} parent=5 // pred_region
      %s135 = ssub.s32 %s8, 1
      %p136 = pneg %p41
      %p137 = pneg %p38
      %p138 = scmp.lt.s32.totalorder %s17, 1
      %s139 = scalar_select %p138, %s17, 1
      %p140 = scmp.lt.s32.totalorder %s18, 0
      %s141 = scalar_select %p140, %s18, 0
      %s142 = sadd.s32 %s141, %s139
      %s143 = smul.addr %s142, 4
      %s144 = scalar_lea.vmem %s1, %s143
      %p145 = pneg %p69
      %p146 = pneg %p66
      %p147 = pneg %p97
      %p148 = pneg %p94
      %p149 = scmp.lt.s32.totalorder %s17, 1
      %s150 = scalar_select %p149, %s17, 1
      %p151 = scmp.lt.s32.totalorder %s18, 0
      %s152 = scalar_select %p151, %s18, 0
      %s153 = sadd.s32 %s152, %s150
      %s154 = smul.addr %s153, 2
      %s155 = scalar_lea.vmem %s2, %s154
      %p156 = scmp.lt.s32.totalorder %s17, 1
      %s157 = scalar_select %p156, %s17, 1
      %p158 = scmp.lt.s32.totalorder %s18, 0
      %s159 = scalar_select %p158, %s18, 0
      %s160 = sadd.s32 %s159, %s157
      %s161 = smul.addr %s160, 4
      %s162 = scalar_lea.vmem %s1, %s161
      %p163 = scmp.lt.s32.totalorder %s17, 1
      %s164 = scalar_select %p163, %s17, 1
      %p165 = scmp.lt.s32.totalorder %s18, 0
      %s166 = scalar_select %p165, %s18, 0
      %s167 = sadd.s32 %s166, %s164
      %s168 = smul.addr %s167, 2
      %s169 = scalar_lea.vmem %s2, %s168
      %v170 = vld [vmem:[%s0] sm:$0x3]
      %v171 = vld [vmem:[%s162] sm:$0xf]
      %vm172 = vcmask 31744
      %v174 = vsel %vm172, %v170, 0
      %vm176 = vcmask 1043456
      %v178 = vsel %vm176, %v171, 0
      %180 = vmatpush.msra.mxu0 0.0
      %181 = vmatpush.msra.mxu0 0.0
      %182 = vmatpush.msra.mxu0 0.0
      %183 = vmatpush.msra.mxu0 0.0
      %184 = vmatpush.msra.mxu0 0.0
      %185 = vmatpush.msra.mxu0 0.0
      %186 = vmatpush.msra.mxu0 0.0
      %187 = vmatpush.msra.mxu0 0.0
      %188 = vmatpush.msra.mxu0 0.0
      %189 = vmatpush.msra.mxu0 0.0
      %190 = vmatpush.msra.mxu0 0.0
      %191 = vmatpush.msra.mxu0 0.0
      %192 = vmatpush.msra.mxu0 0.0
      %193 = vmatpush.msra.mxu0 0.0
      %194 = vmatpush.msra.mxu0 0.0
      %195 = vmatpush.msra.mxu0 %v178
      %196 = vmatmul.f32.gmra.mxu0 %v174
      %v197 = vpop.f32.mrf.mxu0
      %v198 = vadd.f32 0.0, %v197
      %199 = vdwg.mxu0
      %vm200 = vcmask 517120
      %201 = vst.msk [vmem:[%s169] sm:$0x3] %vm200, %v198
      %p202 = scmp.lt.s32.totalorder %s17, 1
      %s203 = scalar_select %p202, %s17, 1
      %p204 = scmp.lt.s32.totalorder %s18, 0
      %s205 = scalar_select %p204, %s18, 0
      %s206 = sadd.s32 %s205, %s203
      %s207 = smul.addr %s206, 2
      %s208 = scalar_lea.vmem %s2, %s207
      // Predicated region
      $region29: #{ucoea_forward.4} parent=27 // pred_check
        %p209 = pneg %p94
      $region30: #{ucoea_forward.4} parent=27 // pred_check_branch
        %211 = sbr.rel (%p209) target = $region32
      $region31: #{ucoea_forward.4} parent=27 // pred_region
        _
      $region32: #{ucoea_forward.4} parent=27 // pred_fallthru
        _
    $region28: #{ucoea_forward.4} parent=5 // pred_fallthru
      _
    %p212 = scmp.le.s32.totalorder 2, %s8
    // Predicated region
    $region33: #{ucoea_forward.4} parent=5 // pred_check
      %p213 = pneg %p212
    $region34: #{ucoea_forward.4} parent=5 // pred_check_branch
      %215 = sbr.rel (%p213) target = $region36
    $region35: #{ucoea_forward.4} parent=5 // pred_region
      %s216 = ssub.s32 %s8, 2
      // Predicated region
      $region37: #{ucoea_forward.4} parent=35 // pred_check
        %p217 = pneg %p100
      $region38: #{ucoea_forward.4} parent=35 // pred_check_branch
        %219 = sbr.rel (%p217) target = $region40
      $region39: #{ucoea_forward.4} parent=35 // pred_region
        %p220 = scmp.lt.s32.totalorder %s19, 1
        %s221 = scalar_select %p220, %s19, 1
        %p222 = scmp.lt.s32.totalorder %s20, 0
        %s223 = scalar_select %p222, %s20, 0
        %s224 = sadd.s32 %s223, %s221
        %s225 = smul.addr %s224, 2
        %s226 = scalar_lea.vmem %s2, %s225
      $region40: #{ucoea_forward.4} parent=35 // pred_fallthru
        _
    $region36: #{ucoea_forward.4} parent=5 // pred_fallthru
      _
  $region6: #{ucoea_forward.4} parent=0 // loop_footer
    %s12 = sadd.s32 1, %s8
  $region7: #{ucoea_forward.4} parent=0 // loop_footer_branch
    %7 = sbr.rel target = $region3
  $region8: #{ucoea_forward.4} parent=0 // loop_exit
    _

// kernel: custom-call.6
$region0: #{custom-call.6}
  %s0 = inlined_call_operand.vmem [shape: f32[2,2], index: 0, kind: output, shape index: {}]

// kernel: ucoea_forward.5
$region0: #{ucoea_forward.5}
  #allocation0 [shape = 'u32[]', space=smem, size = 0x4, offset = 0x4, fixed_abs, tag = 'smem constant byte address 0x4 - core index']
  #allocation1 [shape = 'u32[72,128]{1,0:T(1,128)}', space=vmem, size = 0x9000, scoped, tag = 'internal scratch']
  %s0 = inlined_call_operand.vmem [shape: f32[2,8], index: 0, kind: input, shape index: {}]
  %s1 = inlined_call_operand.vmem [shape: f32[2,4,8,8], index: 1, kind: input, shape index: {}]
  %s2 = inlined_call_operand.vmem [shape: f32[16,8], index: 2, kind: input, shape index: {}]
  %s3 = inlined_call_operand.vmem [shape: f32[8,16], index: 3, kind: input, shape index: {}]
  %s4 = inlined_call_operand.hbm [shape: f32[2,8,16,16], index: 4, kind: input, shape index: {}, may-alias: {4,5}]
  %s5 = inlined_call_operand.hbm [shape: f32[2,8,16,16], index: 5, kind: output, shape index: {}, may-alias: {4,5}]
  %s6 = sld [smem:[#allocation0]]
  $region61: #{ucoea_forward.5} parent=0
    _
  %s8 = ssub.s32 1, %s6
  %s9 = scalar_select 0, %s8, %s6
  $region1: #{ucoea_forward.5} parent=0
    #allocation2 [shape = 'u8[1024]{0}', space=smem, size = 0x400, scoped, tag = 'input window, operand 0, single buffered']
    #allocation3 [shape = 's32[2]{0}', space=sflag, size = 0x8, scoped, tag = 'scoped memory for ucoea_forward.5']
    #allocation4 [shape = 's32[2]{0}', space=sflag, size = 0x8, scoped, tag = 'scoped memory for ucoea_forward.5']
    #allocation5 [shape = 's32[2]{0}', space=sflag, size = 0x8, scoped, tag = 'scoped memory for ucoea_forward.5']
    #allocation6 [shape = 'u8[131072]{0}', space=vmem, size = 0x20000, scoped, tag = 'input window, operand 4']
    #allocation7 [shape = 'u8[131072]{0}', space=vmem, size = 0x20000, scoped, tag = 'output window, operand 0']
    %10 = vsyncpa [#allocation5], 0
    %11 = vsyncpa [#allocation3], 0
    %s12 = scalar_lea.sflag [#allocation3], 1
    %13 = vsyncpa %s12, 0
    %14 = vsyncpa [#allocation4], 0
    %s15 = scalar_lea.sflag [#allocation4], 1
    %16 = vsyncpa %s15, 0
    loop: start=0, step=1, limit=4
    $region2: #{ucoea_forward.5} parent=1 // loop_pre_header
      _
    $region3: #{ucoea_forward.5} parent=1 // loop_header
      %s18 = sphi 0, %s22
      %p19 = scmp.ge.s32.totalorder %s18, 4
      %s25 = sphi 0, %s37
      %s26 = sphi 0, %s33
      %s27 = sphi 0, %s25
      %s28 = sphi 0, %s26
      %s29 = sphi 0, %s27
      %s30 = sphi 0, %s28
      %s38 = sphi 0, %s38
      %s40 = sphi 0, %s38
      %s41 = sphi 0, %s40
      %s55 = sphi 0, %s41
      %s61 = sphi 0, %s63
      %s64 = sphi 0, %s61
      %s65 = sphi 0, %s64
      %s81 = sphi 0, %s65
      %s87 = sphi 0, %s89
      %s90 = sphi 0, %s87
      %s91 = sphi 0, %s90
      %s107 = sphi 0, %s91
      %s111 = sphi 0, %s111
      %s113 = sphi 0, %s111
      %s114 = sphi 0, %s113
      %s128 = sphi 0, %s114
      %s136 = sphi 0, %s138
      %s139 = sphi 0, %s136
      %s140 = sphi 0, %s139
      %s156 = sphi 0, %s140
      %s164 = sphi 0, %s166
      %s167 = sphi 0, %s164
      %s168 = sphi 0, %s167
      %s184 = sphi 0, %s168
    $region4: #{ucoea_forward.5} parent=1 // loop_header_branch
      %21 = sbr.rel (%p19) target = $region8
    $region5: #{ucoea_forward.5} parent=1 // loop_body
      %s23 = ssub.s32 %s18, 1
      %s24 = ssub.s32 %s18, 2
      %s31 = sadd.s32 1, %s26
      %p32 = scmp.ge.s32.totalorder %s31, 1
      %s33 = scalar_select %p32, 0, %s31
      %s34 = sadd.s32 1, %s25
      %s35 = scalar_select %p32, %s34, %s25
      %p36 = scmp.ge.s32.totalorder %s35, 2
      %s37 = scalar_select %p36, 0, %s35
      %s39 = sadd.s32 %s38, 1
      %p42 = scmp.eq.s32.totalorder %s18, 1
      %p43 = scmp.ne.s32.totalorder %s38, %s40
      %p44 = scmp.eq.s32.totalorder %s18, 0
      %p45 = por %p43, %p44
      %p46 = scmp.ne.s32.totalorder %s38, %s40
      %p47 = scmp.eq.s32.totalorder %s23, 1
      %p48 = por %p46, %p47
      %p49 = scmp.ne.s32.totalorder %s40, %s41
      %p50 = scmp.eq.s32.totalorder %s23, 0
      %p51 = por %p49, %p50
      %p52 = scmp.ne.s32.totalorder %s40, %s41
      %p53 = scmp.eq.s32.totalorder %s24, 1
      %p54 = por %p52, %p53
      %p56 = scmp.ne.s32.totalorder %s41, %s55
      %p57 = scmp.eq.s32.totalorder %s24, 0
      %p58 = por %p56, %p57
      %s59 = ssub.s32 %s25, %s37
      %p60 = scmp.eq.s32.totalorder %s59, 0
      %s62 = sadd.s32 %s61, 1
      %s63 = scalar_select %p60, %s61, %s62
      %p66 = pneg %p60
      %p67 = scmp.eq.s32.totalorder %s18, 1
      %p68 = por %p66, %p67
      %p69 = scmp.ne.s32.totalorder %s61, %s64
      %p70 = scmp.eq.s32.totalorder %s18, 0
      %p71 = por %p69, %p70
      %p72 = scmp.ne.s32.totalorder %s61, %s64
      %p73 = scmp.eq.s32.totalorder %s23, 1
      %p74 = por %p72, %p73
      %p75 = scmp.ne.s32.totalorder %s64, %s65
      %p76 = scmp.eq.s32.totalorder %s23, 0
      %p77 = por %p75, %p76
      %p78 = scmp.ne.s32.totalorder %s64, %s65
      %p79 = scmp.eq.s32.totalorder %s24, 1
      %p80 = por %p78, %p79
      %p82 = scmp.ne.s32.totalorder %s65, %s81
      %p83 = scmp.eq.s32.totalorder %s24, 0
      %p84 = por %p82, %p83
      %s85 = ssub.s32 %s26, %s33
      %p86 = scmp.eq.s32.totalorder %s85, 0
      %s88 = sadd.s32 %s87, 1
      %s89 = scalar_select %p86, %s87, %s88
      %p92 = pneg %p86
      %p93 = scmp.eq.s32.totalorder %s18, 1
      %p94 = por %p92, %p93
      %p95 = scmp.ne.s32.totalorder %s87, %s90
      %p96 = scmp.eq.s32.totalorder %s18, 0
      %p97 = por %p95, %p96
      %p98 = scmp.ne.s32.totalorder %s87, %s90
      %p99 = scmp.eq.s32.totalorder %s23, 1
      %p100 = por %p98, %p99
      %p101 = scmp.ne.s32.totalorder %s90, %s91
      %p102 = scmp.eq.s32.totalorder %s23, 0
      %p103 = por %p101, %p102
      %p104 = scmp.ne.s32.totalorder %s90, %s91
      %p105 = scmp.eq.s32.totalorder %s24, 1
      %p106 = por %p104, %p105
      %p108 = scmp.ne.s32.totalorder %s91, %s107
      %p109 = scmp.eq.s32.totalorder %s24, 0
      %p110 = por %p108, %p109
      %s112 = sadd.s32 %s111, 1
      %p115 = scmp.eq.s32.totalorder %s18, 1
      %p116 = scmp.ne.s32.totalorder %s111, %s113
      %p117 = scmp.eq.s32.totalorder %s18, 0
      %p118 = por %p116, %p117
      %p119 = scmp.ne.s32.totalorder %s111, %s113
      %p120 = scmp.eq.s32.totalorder %s23, 1
      %p121 = por %p119, %p120
      %p122 = scmp.ne.s32.totalorder %s113, %s114
      %p123 = scmp.eq.s32.totalorder %s23, 0
      %p124 = por %p122, %p123
      %p125 = scmp.ne.s32.totalorder %s113, %s114
      %p126 = scmp.eq.s32.totalorder %s24, 1
      %p127 = por %p125, %p126
      %p129 = scmp.ne.s32.totalorder %s114, %s128
      %p130 = scmp.eq.s32.totalorder %s24, 0
      %p131 = por %p129, %p130
      %s132 = ssub.s32 %s25, %s37
      %s133 = ssub.s32 %s26, %s33
      %s134 = sor.u32 %s132, %s133
      %p135 = scmp.eq.s32.totalorder %s134, 0
      %s137 = sadd.s32 %s136, 1
      %s138 = scalar_select %p135, %s136, %s137
      %p141 = pneg %p135
      %p142 = scmp.eq.s32.totalorder %s18, 1
      %p143 = por %p141, %p142
      %p144 = scmp.ne.s32.totalorder %s136, %s139
      %p145 = scmp.eq.s32.totalorder %s18, 0
      %p146 = por %p144, %p145
      %p147 = scmp.ne.s32.totalorder %s136, %s139
      %p148 = scmp.eq.s32.totalorder %s23, 1
      %p149 = por %p147, %p148
      %p150 = scmp.ne.s32.totalorder %s139, %s140
      %p151 = scmp.eq.s32.totalorder %s23, 0
      %p152 = por %p150, %p151
      %p153 = scmp.ne.s32.totalorder %s139, %s140
      %p154 = scmp.eq.s32.totalorder %s24, 1
      %p155 = por %p153, %p154
      %p157 = scmp.ne.s32.totalorder %s140, %s156
      %p158 = scmp.eq.s32.totalorder %s24, 0
      %p159 = por %p157, %p158
      %s160 = ssub.s32 %s25, %s37
      %s161 = ssub.s32 %s26, %s33
      %s162 = sor.u32 %s160, %s161
      %p163 = scmp.eq.s32.totalorder %s162, 0
      %s165 = sadd.s32 %s164, 1
      %s166 = scalar_select %p163, %s164, %s165
      %p169 = pneg %p163
      %p170 = scmp.eq.s32.totalorder %s18, 1
      %p171 = por %p169, %p170
      %p172 = scmp.ne.s32.totalorder %s164, %s167
      %p173 = scmp.eq.s32.totalorder %s18, 0
      %p174 = por %p172, %p173
      %p175 = scmp.ne.s32.totalorder %s164, %s167
      %p176 = scmp.eq.s32.totalorder %s23, 1
      %p177 = por %p175, %p176
      %p178 = scmp.ne.s32.totalorder %s167, %s168
      %p179 = scmp.eq.s32.totalorder %s23, 0
      %p180 = por %p178, %p179
      %p181 = scmp.ne.s32.totalorder %s167, %s168
      %p182 = scmp.eq.s32.totalorder %s24, 1
      %p183 = por %p181, %p182
      %p185 = scmp.ne.s32.totalorder %s168, %s184
      %p186 = scmp.eq.s32.totalorder %s24, 0
      %p187 = por %p185, %p186
      %p188 = scmp.le.s32.totalorder 1, %s18
      %p189 = scmp.lt.s32.totalorder %s18, 3
      %p190 = pnand %p188, %p189
      %p191 = pneg %p190
      // Predicated region
      $region9: #{ucoea_forward.5} parent=5 // pred_check
        _
      $region10: #{ucoea_forward.5} parent=5 // pred_check_branch
        %193 = sbr.rel (%p190) target = $region12
      $region11: #{ucoea_forward.5} parent=5 // pred_region
        %s194 = ssub.s32 %s18, 1
        // Predicated region
        $region13: #{ucoea_forward.5} parent=11 // pred_check
          %p195 = pneg %p51
        $region14: #{ucoea_forward.5} parent=11 // pred_check_branch
          %197 = sbr.rel (%p195) target = $region16
        $region15: #{ucoea_forward.5} parent=11 // pred_region
          %199 = vsyncadd [#allocation5], 0
          %s201 = sshll.u32 %s0, 4
          %s202 = int_to_ptr.vmem [resolvable:$true] %s201
          %204 = dma.vmem_to_smem %s202, 32, [#allocation2], [#allocation5]
        $region16: #{ucoea_forward.5} parent=11 // pred_fallthru
          _
        // Predicated region
        $region17: #{ucoea_forward.5} parent=11 // pred_check
          %p205 = pneg %p103
        $region18: #{ucoea_forward.5} parent=11 // pred_check_branch
          %207 = sbr.rel (%p205) target = $region20
        $region19: #{ucoea_forward.5} parent=11 // pred_region
          %s208 = smul.u32 2, %s28
          %p209 = scmp.lt.s32.totalorder %s208, 1
          %s210 = scalar_select %p209, %s208, 1
          %s211 = smul.addr %s210, 8
          %s212 = scalar_lea.vmem %s2, %s211
          %s213 = smul.u32 2, %s28
        $region20: #{ucoea_forward.5} parent=11 // pred_fallthru
          _
        // Predicated region
        $region21: #{ucoea_forward.5} parent=11 // pred_check
          %p214 = pneg %p124
        $region22: #{ucoea_forward.5} parent=11 // pred_check_branch
          %216 = sbr.rel (%p214) target = $region24
        $region23: #{ucoea_forward.5} parent=11 // pred_region
          _
        $region24: #{ucoea_forward.5} parent=11 // pred_fallthru
          _
      $region12: #{ucoea_forward.5} parent=5 // pred_fallthru
        _
      %p217 = scmp.lt.s32.totalorder %s18, 2
      // Predicated region
      $region25: #{ucoea_forward.5} parent=5 // pred_check
        %p218 = pneg %p217
      $region26: #{ucoea_forward.5} parent=5 // pred_check_branch
        %220 = sbr.rel (%p218) target = $region28
      $region27: #{ucoea_forward.5} parent=5 // pred_region
        // Predicated region
        $region29: #{ucoea_forward.5} parent=27 // pred_check
          %p221 = pneg %p71
        $region30: #{ucoea_forward.5} parent=27 // pred_check_branch
          %223 = sbr.rel (%p221) target = $region32
        $region31: #{ucoea_forward.5} parent=27 // pred_region
          %p224 = scmp.lt.s32.totalorder %s25, 1
          %s225 = scalar_select %p224, %s25, 1
          %s226 = smul.addr %s225, 4
          %s227 = smul.addr %s226, 8
          %s228 = scalar_lea.vmem %s1, %s227
        $region32: #{ucoea_forward.5} parent=27 // pred_fallthru
          _
        // Predicated region
        $region33: #{ucoea_forward.5} parent=27 // pred_check
          %p229 = pneg %p146
        $region34: #{ucoea_forward.5} parent=27 // pred_check_branch
          %231 = sbr.rel (%p229) target = $region36
        $region35: #{ucoea_forward.5} parent=27 // pred_region
          %s232 = sand.u32 %s136, 1
          %s233 = scalar_lea.sflag [#allocation3], %s232
          %s234 = sand.u32 %s136, 1
          %s235 = smul.addr %s234, 128
          %s236 = scalar_lea.vmem [#allocation6], %s235
          %s237 = smul.u32 2, %s26
          %239 = vsyncadd %s233, 0
          %s240 = smul.addr %s25, 16
          %s241 = sadd.s32 %s237, %s240
          %s242 = smul.addr %s241, 8
          %s243 = scalar_lea.hbm %s4, %s242
          %s244 = sshll.u32 %s243, 4
          %s245 = int_to_ptr.hbm [resolvable:$true] %s244
          %s246 = sshll.u32 %s236, 4
          %s247 = int_to_ptr.vmem [resolvable:$true] %s246
          %252 = dma.hbm_to_vmem [thread:$0]  %s245, 2048, %s247, %s233, 128, 128, 8
        $region36: #{ucoea_forward.5} parent=27 // pred_fallthru
          _
      $region28: #{ucoea_forward.5} parent=5 // pred_fallthru
        _
      %p253 = scmp.le.s32.totalorder 1, %s18
      %p254 = scmp.lt.s32.totalorder %s18, 3
      %p255 = pnand %p253, %p254
      %p256 = pneg %p255
      // Predicated region
      $region37: #{ucoea_forward.5} parent=5 // pred_check
        _
      $region38: #{ucoea_forward.5} parent=5 // pred_check_branch
        %258 = sbr.rel (%p255) target = $region40
      $region39: #{ucoea_forward.5} parent=5 // pred_region
        %s259 = ssub.s32 %s18, 1
        // Predicated region
        $region41: #{ucoea_forward.5} parent=39 // pred_check
          %p260 = pneg %p51
        $region42: #{ucoea_forward.5} parent=39 // pred_check_branch
          %262 = sbr.rel (%p260) target = $region44
        $region43: #{ucoea_forward.5} parent=39 // pred_region
          %264 = dma.done [#allocation5], 32
        $region44: #{ucoea_forward.5} parent=39 // pred_fallthru
          _
        %s265 = sand.u32 %s139, 1
        %s266 = scalar_lea.sflag [#allocation3], %s265
        %s267 = sand.u32 %s139, 1
        %s268 = smul.addr %s267, 128
        %s269 = scalar_lea.vmem [#allocation6], %s268
        // Predicated region
        $region45: #{ucoea_forward.5} parent=39 // pred_check
          %p270 = pneg %p152
        $region46: #{ucoea_forward.5} parent=39 // pred_check_branch
          %272 = sbr.rel (%p270) target = $region48
        $region47: #{ucoea_forward.5} parent=39 // pred_region
          %274 = dma.done %s266, 2048
        $region48: #{ucoea_forward.5} parent=39 // pred_fallthru
          _
        %275 = sfence
        %p276 = pneg %p51
        %p277 = pneg %p48
        %p278 = scmp.lt.s32.totalorder %s27, 1
        %s279 = scalar_select %p278, %s27, 1
        %s280 = smul.addr %s279, 4
        %s281 = smul.addr %s280, 8
        %s282 = scalar_lea.vmem %s1, %s281
        %p283 = pneg %p77
        %p284 = pneg %p74
        %s285 = smul.u32 2, %s28
        %p286 = scmp.lt.s32.totalorder %s285, 1
        %s287 = scalar_select %p286, %s285, 1
        %s288 = smul.addr %s287, 8
        %s289 = scalar_lea.vmem %s2, %s288
        %p290 = pneg %p103
        %p291 = pneg %p100
        %p292 = pneg %p124
        %p293 = pneg %p121
        %s294 = sand.u32 %s139, 1
        %s295 = scalar_lea.sflag [#allocation3], %s294
        %s296 = sand.u32 %s139, 1
        %s297 = smul.addr %s296, 128
        %s298 = scalar_lea.vmem [#allocation6], %s297
        %p299 = pneg %p152
        %p300 = pneg %p149
        %p301 = pneg %p180
        %p302 = pneg %p177
        %s303 = sand.u32 %s167, 1
        %s304 = scalar_lea.sflag [#allocation4], %s303
        %s305 = sand.u32 %s167, 1
        %s306 = smul.addr %s305, 128
        %s307 = scalar_lea.vmem [#allocation7], %s306
        %p308 = scmp.lt.s32.totalorder %s27, 1
        %s309 = scalar_select %p308, %s27, 1
        %s310 = smul.addr %s309, 4
        %s311 = smul.addr %s310, 8
        %s312 = scalar_lea.vmem %s1, %s311
        %s313 = smul.u32 2, %s28
        %p314 = scmp.lt.s32.totalorder %s313, 1
        %s315 = scalar_select %p314, %s313, 1
        %s316 = smul.addr %s315, 8
        %s317 = scalar_lea.vmem %s2, %s316
        %s318 = smul.u32 2, %s28
        %s319 = smul.u32 2, %s28
        %s320 = smul.u32 2, %s28
        %v321 = vld [vmem:[%s317] sm:$0xff]
        %v322 = vld [vmem:[%s317 + $0x8] sm:$0xff]
        %v323 = vld [vmem:[%s3] sm:$0xff]
        %v324 = vld [vmem:[%s312] sm:$0xff]
        %vm325 = vcmask 64512
        %v327 = vsel %vm325, %v321, 0
        %v330 = vsel %vm325, %v322, 0
        %332 = vmatpush.msra.mxu0 0.0
        %333 = vmatpush.msra.mxu0 0.0
        %334 = vmatpush.msra.mxu0 0.0
        %335 = vmatpush.msra.mxu0 0.0
        %336 = vmatpush.msra.mxu0 0.0
        %337 = vmatpush.msra.mxu0 0.0
        %338 = vmatpush.msra.mxu0 0.0
        %339 = vmatpush.msra.mxu0 0.0
        %340 = vmatpush.msra.mxu0 0.0
        %341 = vmatpush.msra.mxu0 0.0
        %342 = vmatpush.msra.mxu0 0.0
        %343 = vmatpush.msra.mxu0 0.0
        %344 = vmatpush.msra.mxu0 0.0
        %345 = vmatpush.msra.mxu0 0.0
        %346 = vmatpush.msra.mxu0 0.0
        %347 = vmatpush.msra.mxu0 %v324
        %348 = vmatmul.f32.gmra.mxu0 %v327
        %v349 = vpop.f32.mrf.mxu0
        %v350 = vadd.f32 0.0, %v349
        %351 = vmatmul.f32.gmra.mxu0 %v330
        %v352 = vpop.f32.mrf.mxu0
        %v353 = vadd.f32 0.0, %v352
        %354 = vdwg.mxu0
        %v356 = vsel %vm325, %v350, 0
        %v359 = vsel %vm325, %v353, 0
        %361 = vmatpush.msra.mxu0 0.0
        %362 = vmatpush.msra.mxu0 0.0
        %363 = vmatpush.msra.mxu0 0.0
        %364 = vmatpush.msra.mxu0 0.0
        %365 = vmatpush.msra.mxu0 0.0
        %366 = vmatpush.msra.mxu0 0.0
        %367 = vmatpush.msra.mxu0 0.0
        %368 = vmatpush.msra.mxu0 0.0
        %369 = vmatpush.msra.mxu0 0.0
        %370 = vmatpush.msra.mxu0 0.0
        %371 = vmatpush.msra.mxu0 0.0
        %372 = vmatpush.msra.mxu0 0.0
        %373 = vmatpush.msra.mxu0 0.0
        %374 = vmatpush.msra.mxu0 0.0
        %375 = vmatpush.msra.mxu0 0.0
        %376 = vmatpush.msra.mxu0 %v323
        %377 = vmatmul.f32.gmra.mxu0 %v356
        %v378 = vpop.f32.mrf.mxu0
        %v379 = vadd.f32 0.0, %v378
        %380 = vmatmul.f32.gmra.mxu0 %v359
        %v381 = vpop.f32.mrf.mxu0
        %v382 = vadd.f32 0.0, %v381
        %383 = vdwg.mxu0
        %s384 = smul.u32 %s27, 128
        %s385 = sld [smem:[#allocation2 + %s384]]
        %v386 = vstv %s385
        %v387 = vmul.f32 %v386, %v379
        %v388 = vmul.f32 %v386, %v382
        %v389 = vld [vmem:[%s269] sm:$0xff]
        %v390 = vld [vmem:[%s269 + $0x8] sm:$0xff]
        %v391 = vadd.f32 %v387, %v389
        %v392 = vadd.f32 %v388, %v390
        %vm393 = vcmask 130048
        %394 = vst.msk [vmem:[%s307] sm:$0xff] %vm393, %v391
        %395 = vst.msk [vmem:[%s307 + $0x8] sm:$0xff] %vm393, %v392
        %s396 = sadd.s32 %s384, 1
        %s397 = sld [smem:[#allocation2 + %s396]]
        %v398 = vstv %s397
        %v399 = vmul.f32 %v398, %v379
        %v400 = vmul.f32 %v398, %v382
        %s401 = scalar_lea.vmem %s269, 16 [#allocation6]
        %v402 = vld [vmem:[%s401] sm:$0xff]
        %v403 = vld [vmem:[%s401 + $0x8] sm:$0xff]
        %v404 = vadd.f32 %v399, %v402
        %v405 = vadd.f32 %v400, %v403
        %s406 = scalar_lea.vmem %s307, 16 [#allocation7]
        %407 = vst.msk [vmem:[%s406] sm:$0xff] %vm393, %v404
        %408 = vst.msk [vmem:[%s406 + $0x8] sm:$0xff] %vm393, %v405
        %s409 = scalar_lea.vmem %s312, 8
        %v410 = vld [vmem:[%s409] sm:$0xff]
        %411 = vmatpush.msra.mxu0 0.0
        %412 = vmatpush.msra.mxu0 0.0
        %413 = vmatpush.msra.mxu0 0.0
        %414 = vmatpush.msra.mxu0 0.0
        %415 = vmatpush.msra.mxu0 0.0
        %416 = vmatpush.msra.mxu0 0.0
        %417 = vmatpush.msra.mxu0 0.0
        %418 = vmatpush.msra.mxu0 0.0
        %419 = vmatpush.msra.mxu0 0.0
        %420 = vmatpush.msra.mxu0 0.0
        %421 = vmatpush.msra.mxu0 0.0
        %422 = vmatpush.msra.mxu0 0.0
        %423 = vmatpush.msra.mxu0 0.0
        %424 = vmatpush.msra.mxu0 0.0
        %425 = vmatpush.msra.mxu0 0.0
        %426 = vmatpush.msra.mxu0 %v410
        %427 = vmatmul.f32.gmra.mxu0 %v327
        %v428 = vpop.f32.mrf.mxu0
        %v429 = vadd.f32 0.0, %v428
        %430 = vmatmul.f32.gmra.mxu0 %v330
        %v431 = vpop.f32.mrf.mxu0
        %v432 = vadd.f32 0.0, %v431
        %433 = vdwg.mxu0
        %v435 = vsel %vm325, %v429, 0
        %v438 = vsel %vm325, %v432, 0
        %440 = vmatpush.msra.mxu0 0.0
        %441 = vmatpush.msra.mxu0 0.0
        %442 = vmatpush.msra.mxu0 0.0
        %443 = vmatpush.msra.mxu0 0.0
        %444 = vmatpush.msra.mxu0 0.0
        %445 = vmatpush.msra.mxu0 0.0
        %446 = vmatpush.msra.mxu0 0.0
        %447 = vmatpush.msra.mxu0 0.0
        %448 = vmatpush.msra.mxu0 0.0
        %449 = vmatpush.msra.mxu0 0.0
        %450 = vmatpush.msra.mxu0 0.0
        %451 = vmatpush.msra.mxu0 0.0
        %452 = vmatpush.msra.mxu0 0.0
        %453 = vmatpush.msra.mxu0 0.0
        %454 = vmatpush.msra.mxu0 0.0
        %455 = vmatpush.msra.mxu0 %v323
        %456 = vmatmul.f32.gmra.mxu0 %v435
        %v457 = vpop.f32.mrf.mxu0
        %v458 = vadd.f32 0.0, %v457
        %459 = vmatmul.f32.gmra.mxu0 %v438
        %v460 = vpop.f32.mrf.mxu0
        %v461 = vadd.f32 0.0, %v460
        %462 = vdwg.mxu0
        %s463 = sadd.s32 %s384, 2
        %s464 = sld [smem:[#allocation2 + %s463]]
        %v465 = vstv %s464
        %v466 = vmul.f32 %v465, %v458
        %v467 = vmul.f32 %v465, %v461
        %s468 = scalar_lea.vmem %s269, 32 [#allocation6]
        %v469 = vld [vmem:[%s468] sm:$0xff]
        %v470 = vld [vmem:[%s468 + $0x8] sm:$0xff]
        %v471 = vadd.f32 %v466, %v469
        %v472 = vadd.f32 %v467, %v470
        %s473 = scalar_lea.vmem %s307, 32 [#allocation7]
        %474 = vst.msk [vmem:[%s473] sm:$0xff] %vm393, %v471
        %475 = vst.msk [vmem:[%s473 + $0x8] sm:$0xff] %vm393, %v472
        %s476 = sadd.s32 %s384, 3
        %s477 = sld [smem:[#allocation2 + %s476]]
        %v478 = vstv %s477
        %v479 = vmul.f32 %v478, %v458
        %v480 = vmul.f32 %v478, %v461
        %s481 = scalar_lea.vmem %s269, 48 [#allocation6]
        %v482 = vld [vmem:[%s481] sm:$0xff]
        %v483 = vld [vmem:[%s481 + $0x8] sm:$0xff]
        %v484 = vadd.f32 %v479, %v482
        %v485 = vadd.f32 %v480, %v483
        %s486 = scalar_lea.vmem %s307, 48 [#allocation7]
        %487 = vst.msk [vmem:[%s486] sm:$0xff] %vm393, %v484
        %488 = vst.msk [vmem:[%s486 + $0x8] sm:$0xff] %vm393, %v485
        %s489 = scalar_lea.vmem %s312, 16
        %v490 = vld [vmem:[%s489] sm:$0xff]
        %491 = vmatpush.msra.mxu0 0.0
        %492 = vmatpush.msra.mxu0 0.0
        %493 = vmatpush.msra.mxu0 0.0
        %494 = vmatpush.msra.mxu0 0.0
        %495 = vmatpush.msra.mxu0 0.0
        %496 = vmatpush.msra.mxu0 0.0
        %497 = vmatpush.msra.mxu0 0.0
        %498 = vmatpush.msra.mxu0 0.0
        %499 = vmatpush.msra.mxu0 0.0
        %500 = vmatpush.msra.mxu0 0.0
        %501 = vmatpush.msra.mxu0 0.0
        %502 = vmatpush.msra.mxu0 0.0
        %503 = vmatpush.msra.mxu0 0.0
        %504 = vmatpush.msra.mxu0 0.0
        %505 = vmatpush.msra.mxu0 0.0
        %506 = vmatpush.msra.mxu0 %v490
        %507 = vmatmul.f32.gmra.mxu0 %v327
        %v508 = vpop.f32.mrf.mxu0
        %v509 = vadd.f32 0.0, %v508
        %510 = vmatmul.f32.gmra.mxu0 %v330
        %v511 = vpop.f32.mrf.mxu0
        %v512 = vadd.f32 0.0, %v511
        %513 = vdwg.mxu0
        %v515 = vsel %vm325, %v509, 0
        %v518 = vsel %vm325, %v512, 0
        %520 = vmatpush.msra.mxu0 0.0
        %521 = vmatpush.msra.mxu0 0.0
        %522 = vmatpush.msra.mxu0 0.0
        %523 = vmatpush.msra.mxu0 0.0
        %524 = vmatpush.msra.mxu0 0.0
        %525 = vmatpush.msra.mxu0 0.0
        %526 = vmatpush.msra.mxu0 0.0
        %527 = vmatpush.msra.mxu0 0.0
        %528 = vmatpush.msra.mxu0 0.0
        %529 = vmatpush.msra.mxu0 0.0
        %530 = vmatpush.msra.mxu0 0.0
        %531 = vmatpush.msra.mxu0 0.0
        %532 = vmatpush.msra.mxu0 0.0
        %533 = vmatpush.msra.mxu0 0.0
        %534 = vmatpush.msra.mxu0 0.0
        %535 = vmatpush.msra.mxu0 %v323
        %536 = vmatmul.f32.gmra.mxu0 %v515
        %v537 = vpop.f32.mrf.mxu0
        %v538 = vadd.f32 0.0, %v537
        %539 = vmatmul.f32.gmra.mxu0 %v518
        %v540 = vpop.f32.mrf.mxu0
        %v541 = vadd.f32 0.0, %v540
        %542 = vdwg.mxu0
        %s543 = sadd.s32 %s384, 4
        %s544 = sld [smem:[#allocation2 + %s543]]
        %v545 = vstv %s544
        %v546 = vmul.f32 %v545, %v538
        %v547 = vmul.f32 %v545, %v541
        %s548 = scalar_lea.vmem %s269, 64 [#allocation6]
        %v549 = vld [vmem:[%s548] sm:$0xff]
        %v550 = vld [vmem:[%s548 + $0x8] sm:$0xff]
        %v551 = vadd.f32 %v546, %v549
        %v552 = vadd.f32 %v547, %v550
        %s553 = scalar_lea.vmem %s307, 64 [#allocation7]
        %554 = vst.msk [vmem:[%s553] sm:$0xff] %vm393, %v551
        %555 = vst.msk [vmem:[%s553 + $0x8] sm:$0xff] %vm393, %v552
        %s556 = sadd.s32 %s384, 5
        %s557 = sld [smem:[#allocation2 + %s556]]
        %v558 = vstv %s557
        %v559 = vmul.f32 %v558, %v538
        %v560 = vmul.f32 %v558, %v541
        %s561 = scalar_lea.vmem %s269, 80 [#allocation6]
        %v562 = vld [vmem:[%s561] sm:$0xff]
        %v563 = vld [vmem:[%s561 + $0x8] sm:$0xff]
        %v564 = vadd.f32 %v559, %v562
        %v565 = vadd.f32 %v560, %v563
        %s566 = scalar_lea.vmem %s307, 80 [#allocation7]
        %567 = vst.msk [vmem:[%s566] sm:$0xff] %vm393, %v564
        %568 = vst.msk [vmem:[%s566 + $0x8] sm:$0xff] %vm393, %v565
        %s569 = scalar_lea.vmem %s312, 24
        %v570 = vld [vmem:[%s569] sm:$0xff]
        %571 = vmatpush.msra.mxu0 0.0
        %572 = vmatpush.msra.mxu0 0.0
        %573 = vmatpush.msra.mxu0 0.0
        %574 = vmatpush.msra.mxu0 0.0
        %575 = vmatpush.msra.mxu0 0.0
        %576 = vmatpush.msra.mxu0 0.0
        %577 = vmatpush.msra.mxu0 0.0
        %578 = vmatpush.msra.mxu0 0.0
        %579 = vmatpush.msra.mxu0 0.0
        %580 = vmatpush.msra.mxu0 0.0
        %581 = vmatpush.msra.mxu0 0.0
        %582 = vmatpush.msra.mxu0 0.0
        %583 = vmatpush.msra.mxu0 0.0
        %584 = vmatpush.msra.mxu0 0.0
        %585 = vmatpush.msra.mxu0 0.0
        %586 = vmatpush.msra.mxu0 %v570
        %587 = vmatmul.f32.gmra.mxu0 %v327
        %v588 = vpop.f32.mrf.mxu0
        %v589 = vadd.f32 0.0, %v588
        %590 = vmatmul.f32.gmra.mxu0 %v330
        %v591 = vpop.f32.mrf.mxu0
        %v592 = vadd.f32 0.0, %v591
        %593 = vdwg.mxu0
        %v595 = vsel %vm325, %v589, 0
        %v598 = vsel %vm325, %v592, 0
        %600 = vmatpush.msra.mxu0 0.0
        %601 = vmatpush.msra.mxu0 0.0
        %602 = vmatpush.msra.mxu0 0.0
        %603 = vmatpush.msra.mxu0 0.0
        %604 = vmatpush.msra.mxu0 0.0
        %605 = vmatpush.msra.mxu0 0.0
        %606 = vmatpush.msra.mxu0 0.0
        %607 = vmatpush.msra.mxu0 0.0
        %608 = vmatpush.msra.mxu0 0.0
        %609 = vmatpush.msra.mxu0 0.0
        %610 = vmatpush.msra.mxu0 0.0
        %611 = vmatpush.msra.mxu0 0.0
        %612 = vmatpush.msra.mxu0 0.0
        %613 = vmatpush.msra.mxu0 0.0
        %614 = vmatpush.msra.mxu0 0.0
        %615 = vmatpush.msra.mxu0 %v323
        %616 = vmatmul.f32.gmra.mxu0 %v595
        %v617 = vpop.f32.mrf.mxu0
        %v618 = vadd.f32 0.0, %v617
        %619 = vmatmul.f32.gmra.mxu0 %v598
        %v620 = vpop.f32.mrf.mxu0
        %v621 = vadd.f32 0.0, %v620
        %622 = vdwg.mxu0
        %s623 = sadd.s32 %s384, 6
        %s624 = sld [smem:[#allocation2 + %s623]]
        %v625 = vstv %s624
        %v626 = vmul.f32 %v625, %v618
        %v627 = vmul.f32 %v625, %v621
        %s628 = scalar_lea.vmem %s269, 96 [#allocation6]
        %v629 = vld [vmem:[%s628] sm:$0xff]
        %v630 = vld [vmem:[%s628 + $0x8] sm:$0xff]
        %v631 = vadd.f32 %v626, %v629
        %v632 = vadd.f32 %v627, %v630
        %s633 = scalar_lea.vmem %s307, 96 [#allocation7]
        %634 = vst.msk [vmem:[%s633] sm:$0xff] %vm393, %v631
        %635 = vst.msk [vmem:[%s633 + $0x8] sm:$0xff] %vm393, %v632
        %s636 = sadd.s32 %s384, 7
        %s637 = sld [smem:[#allocation2 + %s636]]
        %v638 = vstv %s637
        %v639 = vmul.f32 %v638, %v618
        %v640 = vmul.f32 %v638, %v621
        %s641 = scalar_lea.vmem %s269, 112 [#allocation6]
        %v642 = vld [vmem:[%s641] sm:$0xff]
        %v643 = vld [vmem:[%s641 + $0x8] sm:$0xff]
        %v644 = vadd.f32 %v639, %v642
        %v645 = vadd.f32 %v640, %v643
        %s646 = scalar_lea.vmem %s307, 112 [#allocation7]
        %647 = vst.msk [vmem:[%s646] sm:$0xff] %vm393, %v644
        %648 = vst.msk [vmem:[%s646 + $0x8] sm:$0xff] %vm393, %v645
        %s649 = sand.u32 %s167, 1
        %s650 = scalar_lea.sflag [#allocation4], %s649
        %s651 = sand.u32 %s167, 1
        %s652 = smul.addr %s651, 128
        %s653 = scalar_lea.vmem [#allocation7], %s652
        // Predicated region
        $region49: #{ucoea_forward.5} parent=39 // pred_check
          %p654 = pneg %p177
        $region50: #{ucoea_forward.5} parent=39 // pred_check_branch
          %656 = sbr.rel (%p654) target = $region52
        $region51: #{ucoea_forward.5} parent=39 // pred_region
          %s657 = smul.u32 2, %s28
          %659 = vsyncadd %s650, 0
          %s660 = smul.addr %s27, 16
          %s661 = sadd.s32 %s657, %s660
          %s662 = smul.addr %s661, 8
          %s663 = scalar_lea.hbm %s5, %s662
          %s664 = sshll.u32 %s653, 4
          %s665 = int_to_ptr.vmem [resolvable:$true] %s664
          %s666 = sshll.u32 %s663, 4
          %s667 = int_to_ptr.hbm [resolvable:$true] %s666
          %672 = dma.vmem_to_hbm [thread:$0]  %s665, 2048, %s667, %s650, 128, 128, 8
        $region52: #{ucoea_forward.5} parent=39 // pred_fallthru
          _
      $region40: #{ucoea_forward.5} parent=5 // pred_fallthru
        _
      %p673 = scmp.le.s32.totalorder 2, %s18
      // Predicated region
      $region53: #{ucoea_forward.5} parent=5 // pred_check
        %p674 = pneg %p673
      $region54: #{ucoea_forward.5} parent=5 // pred_check_branch
        %676 = sbr.rel (%p674) target = $region56
      $region55: #{ucoea_forward.5} parent=5 // pred_region
        %s677 = ssub.s32 %s18, 2
        // Predicated region
        $region57: #{ucoea_forward.5} parent=55 // pred_check
          %p678 = pneg %p183
        $region58: #{ucoea_forward.5} parent=55 // pred_check_branch
          %680 = sbr.rel (%p678) target = $region60
        $region59: #{ucoea_forward.5} parent=55 // pred_region
          %s681 = sand.u32 %s168, 1
          %s682 = scalar_lea.sflag [#allocation4], %s681
          %s683 = sand.u32 %s168, 1
          %s684 = smul.addr %s683, 128
          %s685 = scalar_lea.vmem [#allocation7], %s684
          %687 = dma.done %s682, 2048
        $region60: #{ucoea_forward.5} parent=55 // pred_fallthru
          _
      $region56: #{ucoea_forward.5} parent=5 // pred_fallthru
        _
    $region6: #{ucoea_forward.5} parent=1 // loop_footer
      %s22 = sadd.s32 1, %s18
    $region7: #{ucoea_forward.5} parent=1 // loop_footer_branch
      %17 = sbr.rel target = $region3
    $region8: #{ucoea_forward.5} parent=1 // loop_exit
      _
    %688 = vsyncpa [#allocation3], 1
    %s689 = scalar_lea.sflag [#allocation3], 1
    %690 = vsyncpa %s689, 1
    %691 = vsyncpa [#allocation4], 1
    %s692 = scalar_lea.sflag [#allocation4], 1
    %693 = vsyncpa %s692, 1
    %694 = vsyncpa [#allocation5], 1
    %s695 = scalar_lea.sflag [#allocation5], 1
    %696 = vsyncpa %s695, 1

</llo_original>
